<compile_context>
chip_gen: v6e
topology: v6e:2x2x1
jax: 0.10.0
libtpu: 0.0.40
codegen_flags: <defaults>
</compile_context>

<pallas_src>
import functools

import jax
import jax.numpy as jnp
from jax.experimental import pallas as pl
from jax.experimental.pallas import tpu as pltpu


def _cdiv(a, b):
    return (a + b - 1) // b


def _round_up(x, m):
    return ((x + m - 1) // m) * m


def _leaky_relu(x, slope):
    return jnp.where(x >= 0, x, slope * x)


def _generator_mlp_kernel(noise_ref, labels_ref, *refs, num_layers):
    """Fused Generator MLP for one row-tile of the batch.

    refs = (w0_noise, w0_labels, b0, w1, b1, ..., w_{L-1}, b_{L-1}, out_ref)
    All weights/biases are full-array VMEM blocks resident across the grid.
    """
    out_ref = refs[-1]
    wb = refs[:-1]

    n = noise_ref[...]
    l = labels_ref[...]
    # combine_tensors() casts to float32; only cast when the input isn't f32.
    if n.dtype != jnp.float32:
        n = n.astype(jnp.float32)
    if l.dtype != jnp.float32:
        l = l.astype(jnp.float32)

    # Layer 0: concat fused via split matmul (no lane-dim concat, no wrapper concat).
    h = (
        jnp.dot(n, wb[0][...], preferred_element_type=jnp.float32,
                precision=jax.lax.Precision.HIGHEST)
        + jnp.dot(l, wb[1][...], preferred_element_type=jnp.float32,
                  precision=jax.lax.Precision.HIGHEST)
        + wb[2][...]
    )
    # Dropout(0.1) -> identity in eval mode.
    h = _leaky_relu(h, 0.05 if num_layers == 1 else 0.2)

    for i in range(1, num_layers):
        w = wb[3 + 2 * (i - 1)][...]   # (in, out)
        b = wb[4 + 2 * (i - 1)][...]   # (1, out)
        h = jnp.dot(h, w, preferred_element_type=jnp.float32,
                    precision=jax.lax.Precision.HIGHEST) + b
        slope = 0.05 if i == num_layers - 1 else 0.2
        h = _leaky_relu(h, slope)

    out_ref[...] = h.astype(out_ref.dtype)


def init_generator_params(key, noise_dim, hidden_dims, num_bands):
    """Deterministic PyTorch-default-style init: U(-1/sqrt(fan_in), +...)."""
    dims = [noise_dim] + list(hidden_dims) + [num_bands]
    params = []
    for i in range(len(dims) - 1):
        fan_in, fan_out = dims[i], dims[i + 1]
        key, kw, kb = jax.random.split(key, 3)
        bound = 1.0 / jnp.sqrt(jnp.float32(fan_in))
        w = jax.random.uniform(kw, (fan_in, fan_out), jnp.float32, -bound, bound)
        b = jax.random.uniform(kb, (1, fan_out), jnp.float32, -bound, bound)
        params.append((w, b))
    return params


def _choose_block_rows(batch, max_block_rows, target_tiles):
    """Row tile: ~target_tiles grid steps, multiple of 8, >=2 tiles if possible."""
    batch8 = _round_up(batch, 8)
    br = _round_up(_cdiv(batch, target_tiles), 8)
    br = min(br, max_block_rows, batch8)
    if batch8 >= 16:
        # At least 2 tiles so the "parallel" batch axis feeds both v7x TCs.
        br = min(br, _round_up(_cdiv(batch8, 2), 8))
    return max(br, 8)


@functools.partial(
    jax.jit, static_argnames=("num_bands", "max_block_rows", "target_tiles"))
def generator_forward(noise, labels, params_flat, num_bands,
                      max_block_rows=2048, target_tiles=8):
    batch, noise_feats = noise.shape
    label_feats = labels.shape[1]
    num_layers = len(params_flat) // 2

    # --- adaptive batch tiling (amortize per-step overhead, minimal padding) ---
    br = _choose_block_rows(batch, max_block_rows, target_tiles)
    batch_pad = _round_up(batch, br)
    if batch_pad != batch:
        noise = jnp.pad(noise, ((0, batch_pad - batch), (0, 0)))
        labels = jnp.pad(labels, ((0, batch_pad - batch), (0, 0)))

    weights = [params_flat[2 * i] for i in range(num_layers)]
    biases = [params_flat[2 * i + 1] for i in range(num_layers)]

    # --- split first weight so the concat fuses into two dots ---
    w0_noise = weights[0][:noise_feats]
    w0_labels = weights[0][noise_feats:]
    kernel_params = [w0_noise, w0_labels, biases[0]]
    for i in range(1, num_layers):
        kernel_params += [weights[i], biases[i]]

    kernel = functools.partial(_generator_mlp_kernel, num_layers=num_layers)

    grid = (batch_pad // br,)
    # Activations/output stream by row-tile; weights/biases keep block index
    # (0, 0) for every grid step so they stay resident in VMEM.
    noise_spec = pl.BlockSpec((br, noise_feats), lambda i: (i, 0))
    labels_spec = pl.BlockSpec((br, label_feats), lambda i: (i, 0))
    wb_specs = [pl.BlockSpec(p.shape, lambda i: (0, 0)) for p in kernel_params]
    # Native-width output block (last dim == full array dim is legal): avoids
    # 4x padded HBM writeback and the wrapper slice copy.
    out_spec = pl.BlockSpec((br, num_bands), lambda i: (i, 0))

    out = pl.pallas_call(
        kernel,
        out_shape=jax.ShapeDtypeStruct((batch_pad, num_bands), jnp.float32),
        grid=grid,
        in_specs=[noise_spec, labels_spec] + wb_specs,
        out_specs=out_spec,
        compiler_params=pltpu.CompilerParams(
            dimension_semantics=("parallel",),          # shard row tiles across TCs
            vmem_limit_bytes=32 * 1024 * 1024,          # lift v5e's 16 MiB default
        ),
    )(noise, labels, *kernel_params)

    if batch_pad != batch:
        out = out[:batch]
    return out


if __name__ == "__main__":
    # Small shapes consistent with the module: the Generator's first Linear
    # takes noise_dim features, which (per the forward) must equal
    # noise-features + label-features after concatenation.
    batch = 64
    noise_feats = 24
    label_feats = 8
    noise_dim = noise_feats + label_feats   # 32
    hidden_dims = [64, 64]
    num_bands = 32

    key = jax.random.PRNGKey(0)
    k_noise, k_labels, k_params = jax.random.split(key, 3)

    noise = jax.random.normal(k_noise, (batch, noise_feats), jnp.float32)
    labels = jax.random.normal(k_labels, (batch, label_feats), jnp.float32)

    params = init_generator_params(k_params, noise_dim, hidden_dims, num_bands)
    params_flat = tuple(t for wb in params for t in wb)

    out = generator_forward(noise, labels, params_flat, num_bands)
    jax.block_until_ready(out)

    # Pure-JAX reference of the same math (with the original concat + full W0).
    def ref_forward(noise, labels, params):
        h = jnp.concatenate([noise, labels], axis=1).astype(jnp.float32)
        for i, (w, b) in enumerate(params):
            h = jnp.dot(h, w, precision=jax.lax.Precision.HIGHEST) + b
            slope = 0.05 if i == len(params) - 1 else 0.2
            h = jnp.where(h >= 0, h, slope * h)
        return h

    ref = ref_forward(noise, labels, params)
    assert out.shape == (batch, num_bands)
    assert jnp.allclose(out, ref, atol=1e-5, rtol=1e-5)
    print("KERNEL_OK")
</pallas_src>

<mosaic_0001>
module attributes {stable_mosaic.version = 11 : i64} {
  func.func @_generator_mlp_kernel(%arg0: i32, %arg1: memref<8x24xf32, #tpu.memory_space<vmem>>, %arg2: memref<8x8xf32, #tpu.memory_space<vmem>>, %arg3: memref<24x64xf32, #tpu.memory_space<vmem>>, %arg4: memref<8x64xf32, #tpu.memory_space<vmem>>, %arg5: memref<1x64xf32, #tpu.memory_space<vmem>>, %arg6: memref<64x64xf32, #tpu.memory_space<vmem>>, %arg7: memref<1x64xf32, #tpu.memory_space<vmem>>, %arg8: memref<64x32xf32, #tpu.memory_space<vmem>>, %arg9: memref<1x32xf32, #tpu.memory_space<vmem>>, %arg10: memref<8x32xf32, #tpu.memory_space<vmem>>) attributes {dimension_semantics = [#tpu.dimension_semantics<parallel>], iteration_bounds = array<i64: 8>, scalar_prefetch = 0 : i64, scratch_operands = 0 : i64, tpu.core_type = #tpu.core_type<tc>, window_params = [{transform_indices = @transform_0, window_bounds = array<i64: 8, 24>}, {transform_indices = @transform_1, window_bounds = array<i64: 8, 8>}, {pipeline_mode = #tpu.pipeline_mode<synchronous>, transform_indices = @transform_2, window_bounds = array<i64: 24, 64>}, {pipeline_mode = #tpu.pipeline_mode<synchronous>, transform_indices = @transform_3, window_bounds = array<i64: 8, 64>}, {pipeline_mode = #tpu.pipeline_mode<synchronous>, transform_indices = @transform_4, window_bounds = array<i64: 1, 64>}, {pipeline_mode = #tpu.pipeline_mode<synchronous>, transform_indices = @transform_5, window_bounds = array<i64: 64, 64>}, {pipeline_mode = #tpu.pipeline_mode<synchronous>, transform_indices = @transform_6, window_bounds = array<i64: 1, 64>}, {pipeline_mode = #tpu.pipeline_mode<synchronous>, transform_indices = @transform_7, window_bounds = array<i64: 64, 32>}, {pipeline_mode = #tpu.pipeline_mode<synchronous>, transform_indices = @transform_8, window_bounds = array<i64: 1, 32>}, {transform_indices = @transform_9, window_bounds = array<i64: 8, 32>}]} {
    %c0 = arith.constant 0 : index
    %c0_0 = arith.constant 0 : index
    %0 = vector.load %arg1[%c0, %c0_0] : memref<8x24xf32, #tpu.memory_space<vmem>>, vector<8x24xf32>
    %c0_1 = arith.constant 0 : index
    %c0_2 = arith.constant 0 : index
    %1 = vector.load %arg2[%c0_1, %c0_2] : memref<8x8xf32, #tpu.memory_space<vmem>>, vector<8x8xf32>
    %c0_3 = arith.constant 0 : index
    %c0_4 = arith.constant 0 : index
    %2 = vector.load %arg3[%c0_3, %c0_4] : memref<24x64xf32, #tpu.memory_space<vmem>>, vector<24x64xf32>
    %cst = arith.constant dense<0.000000e+00> : vector<8x64xf32>
    %3 = tpu.matmul %0, %2, %cst {dimension_numbers = #tpu.dot_dimension_numbers<[1], [0], [0], [1], [0, 0, 1, 1], [], []>, precision = #tpu.contract_precision<fp32>} : vector<8x24xf32>, vector<24x64xf32>, vector<8x64xf32> -> vector<8x64xf32>
    %c0_5 = arith.constant 0 : index
    %c0_6 = arith.constant 0 : index
    %4 = vector.load %arg4[%c0_5, %c0_6] : memref<8x64xf32, #tpu.memory_space<vmem>>, vector<8x64xf32>
    %cst_7 = arith.constant dense<0.000000e+00> : vector<8x64xf32>
    %5 = tpu.matmul %1, %4, %cst_7 {dimension_numbers = #tpu.dot_dimension_numbers<[1], [0], [0], [1], [0, 0, 1, 1], [], []>, precision = #tpu.contract_precision<fp32>} : vector<8x8xf32>, vector<8x64xf32>, vector<8x64xf32> -> vector<8x64xf32>
    %6 = arith.addf %3, %5 : vector<8x64xf32>
    %c0_8 = arith.constant 0 : index
    %c0_9 = arith.constant 0 : index
    %7 = vector.load %arg5[%c0_8, %c0_9] : memref<1x64xf32, #tpu.memory_space<vmem>>, vector<1x64xf32>
    %8 = vector.broadcast %7 : vector<1x64xf32> to vector<8x64xf32>
    %9 = arith.addf %6, %8 : vector<8x64xf32>
    %cst_10 = arith.constant 0.000000e+00 : f32
    %10 = vector.broadcast %cst_10 : f32 to vector<8x64xf32>
    %11 = arith.cmpf oge, %9, %10 : vector<8x64xf32>
    %cst_11 = arith.constant 2.000000e-01 : f32
    %12 = vector.broadcast %cst_11 : f32 to vector<8x64xf32>
    %13 = arith.mulf %12, %9 : vector<8x64xf32>
    %14 = arith.select %11, %9, %13 : vector<8x64xi1>, vector<8x64xf32>
    %c0_12 = arith.constant 0 : index
    %c0_13 = arith.constant 0 : index
    %15 = vector.load %arg6[%c0_12, %c0_13] : memref<64x64xf32, #tpu.memory_space<vmem>>, vector<64x64xf32>
    %c0_14 = arith.constant 0 : index
    %c0_15 = arith.constant 0 : index
    %16 = vector.load %arg7[%c0_14, %c0_15] : memref<1x64xf32, #tpu.memory_space<vmem>>, vector<1x64xf32>
    %cst_16 = arith.constant dense<0.000000e+00> : vector<8x64xf32>
    %17 = tpu.matmul %14, %15, %cst_16 {dimension_numbers = #tpu.dot_dimension_numbers<[1], [0], [0], [1], [0, 0, 1, 1], [], []>, precision = #tpu.contract_precision<fp32>} : vector<8x64xf32>, vector<64x64xf32>, vector<8x64xf32> -> vector<8x64xf32>
    %18 = vector.broadcast %16 : vector<1x64xf32> to vector<8x64xf32>
    %19 = arith.addf %17, %18 : vector<8x64xf32>
    %cst_17 = arith.constant 0.000000e+00 : f32
    %20 = vector.broadcast %cst_17 : f32 to vector<8x64xf32>
    %21 = arith.cmpf oge, %19, %20 : vector<8x64xf32>
    %cst_18 = arith.constant 2.000000e-01 : f32
    %22 = vector.broadcast %cst_18 : f32 to vector<8x64xf32>
    %23 = arith.mulf %22, %19 : vector<8x64xf32>
    %24 = arith.select %21, %19, %23 : vector<8x64xi1>, vector<8x64xf32>
    %c0_19 = arith.constant 0 : index
    %c0_20 = arith.constant 0 : index
    %25 = vector.load %arg8[%c0_19, %c0_20] : memref<64x32xf32, #tpu.memory_space<vmem>>, vector<64x32xf32>
    %c0_21 = arith.constant 0 : index
    %c0_22 = arith.constant 0 : index
    %26 = vector.load %arg9[%c0_21, %c0_22] : memref<1x32xf32, #tpu.memory_space<vmem>>, vector<1x32xf32>
    %cst_23 = arith.constant dense<0.000000e+00> : vector<8x32xf32>
    %27 = tpu.matmul %24, %25, %cst_23 {dimension_numbers = #tpu.dot_dimension_numbers<[1], [0], [0], [1], [0, 0, 1, 1], [], []>, precision = #tpu.contract_precision<fp32>} : vector<8x64xf32>, vector<64x32xf32>, vector<8x32xf32> -> vector<8x32xf32>
    %28 = vector.broadcast %26 : vector<1x32xf32> to vector<8x32xf32>
    %29 = arith.addf %27, %28 : vector<8x32xf32>
    %cst_24 = arith.constant 0.000000e+00 : f32
    %30 = vector.broadcast %cst_24 : f32 to vector<8x32xf32>
    %31 = arith.cmpf oge, %29, %30 : vector<8x32xf32>
    %cst_25 = arith.constant 5.000000e-02 : f32
    %32 = vector.broadcast %cst_25 : f32 to vector<8x32xf32>
    %33 = arith.mulf %32, %29 : vector<8x32xf32>
    %34 = arith.select %31, %29, %33 : vector<8x32xi1>, vector<8x32xf32>
    %c0_26 = arith.constant 0 : index
    %c0_27 = arith.constant 0 : index
    %35 = vector.load %arg10[%c0_26, %c0_27] : memref<8x32xf32, #tpu.memory_space<vmem>>, vector<8x32xf32>
    tpu.vector_store %arg10[%c0_26, %c0_27], %34 {strides = array<i32>} : memref<8x32xf32, #tpu.memory_space<vmem>>, vector<8x32xf32>,
    return
  }
  func.func @transform_0(%arg0: i32) -> (i32, i32) {
    %c0_i32 = arith.constant 0 : i32
    %c0_i32_0 = arith.constant 0 : i32
    return %arg0, %c0_i32 : i32, i32
  }
  func.func @transform_1(%arg0: i32) -> (i32, i32) {
    %c0_i32 = arith.constant 0 : i32
    %c0_i32_0 = arith.constant 0 : i32
    return %arg0, %c0_i32 : i32, i32
  }
  func.func @transform_2(%arg0: i32) -> (i32, i32) {
    %c0_i32 = arith.constant 0 : i32
    %c0_i32_0 = arith.constant 0 : i32
    %c0_i32_1 = arith.constant 0 : i32
    return %c0_i32, %c0_i32_0 : i32, i32
  }
  func.func @transform_3(%arg0: i32) -> (i32, i32) {
    %c0_i32 = arith.constant 0 : i32
    %c0_i32_0 = arith.constant 0 : i32
    %c0_i32_1 = arith.constant 0 : i32
    return %c0_i32, %c0_i32_0 : i32, i32
  }
  func.func @transform_4(%arg0: i32) -> (i32, i32) {
    %c0_i32 = arith.constant 0 : i32
    %c0_i32_0 = arith.constant 0 : i32
    %c0_i32_1 = arith.constant 0 : i32
    return %c0_i32, %c0_i32_0 : i32, i32
  }
  func.func @transform_5(%arg0: i32) -> (i32, i32) {
    %c0_i32 = arith.constant 0 : i32
    %c0_i32_0 = arith.constant 0 : i32
    %c0_i32_1 = arith.constant 0 : i32
    return %c0_i32, %c0_i32_0 : i32, i32
  }
  func.func @transform_6(%arg0: i32) -> (i32, i32) {
    %c0_i32 = arith.constant 0 : i32
    %c0_i32_0 = arith.constant 0 : i32
    %c0_i32_1 = arith.constant 0 : i32
    return %c0_i32, %c0_i32_0 : i32, i32
  }
  func.func @transform_7(%arg0: i32) -> (i32, i32) {
    %c0_i32 = arith.constant 0 : i32
    %c0_i32_0 = arith.constant 0 : i32
    %c0_i32_1 = arith.constant 0 : i32
    return %c0_i32, %c0_i32_0 : i32, i32
  }
  func.func @transform_8(%arg0: i32) -> (i32, i32) {
    %c0_i32 = arith.constant 0 : i32
    %c0_i32_0 = arith.constant 0 : i32
    %c0_i32_1 = arith.constant 0 : i32
    return %c0_i32, %c0_i32_0 : i32, i32
  }
  func.func @transform_9(%arg0: i32) -> (i32, i32) {
    %c0_i32 = arith.constant 0 : i32
    %c0_i32_0 = arith.constant 0 : i32
    return %arg0, %c0_i32 : i32, i32
  }
}

</mosaic_0001>

<llo_original>
// kernel: generator_forward.1
$region0: #{generator_forward.1}
  #allocation0 [shape = 'u32[]', space=smem, size = 0x4, offset = 0x4, fixed_abs, tag = 'smem constant byte address 0x4 - core index']
  #allocation1 [shape = 'u32[144,128]{1,0:T(1,128)}', space=vmem, size = 0x12000, scoped, tag = 'internal scratch']
  %s0 = inlined_call_operand.vmem [shape: f32[64,24], index: 0, kind: input, shape index: {}]
  %s1 = inlined_call_operand.vmem [shape: f32[64,8], index: 1, kind: input, shape index: {}]
  %s2 = inlined_call_operand.vmem [shape: f32[24,64], index: 2, kind: input, shape index: {}]
  %s3 = inlined_call_operand.vmem [shape: f32[8,64], index: 3, kind: input, shape index: {}]
  %s4 = inlined_call_operand.vmem [shape: f32[1,64], index: 4, kind: input, shape index: {}]
  %s5 = inlined_call_operand.vmem [shape: f32[64,64], index: 5, kind: input, shape index: {}]
  %s6 = inlined_call_operand.vmem [shape: f32[1,64], index: 6, kind: input, shape index: {}]
  %s7 = inlined_call_operand.vmem [shape: f32[64,32], index: 7, kind: input, shape index: {}]
  %s8 = inlined_call_operand.vmem [shape: f32[1,32], index: 8, kind: input, shape index: {}]
  %s9 = inlined_call_operand.vmem [shape: f32[64,32], index: 9, kind: output, shape index: {}]
  %s10 = sld [smem:[#allocation0]]
  $region69: #{generator_forward.1} parent=0
    _
  %s12 = ssub.s32 1, %s10
  %s13 = scalar_select 0, %s12, %s10
  loop: start=0, step=1, limit=10
  $region2: #{generator_forward.1} parent=0 // loop_pre_header
    _
  $region3: #{generator_forward.1} parent=0 // loop_header
    %s15 = sphi 0, %s19
    %p16 = scmp.ge.s32.totalorder %s15, 10
    %s25 = sphi 0, %s27
    %s28 = sphi 0, %s25
    %s29 = sphi 0, %s28
    %s45 = sphi 0, %s29
    %s51 = sphi 0, %s53
    %s54 = sphi 0, %s51
    %s55 = sphi 0, %s54
    %s71 = sphi 0, %s55
    %s75 = sphi 0, %s75
    %s77 = sphi 0, %s75
    %s78 = sphi 0, %s77
    %s92 = sphi 0, %s78
    %s96 = sphi 0, %s96
    %s98 = sphi 0, %s96
    %s99 = sphi 0, %s98
    %s113 = sphi 0, %s99
    %s117 = sphi 0, %s117
    %s119 = sphi 0, %s117
    %s120 = sphi 0, %s119
    %s134 = sphi 0, %s120
    %s138 = sphi 0, %s138
    %s140 = sphi 0, %s138
    %s141 = sphi 0, %s140
    %s155 = sphi 0, %s141
    %s159 = sphi 0, %s159
    %s161 = sphi 0, %s159
    %s162 = sphi 0, %s161
    %s176 = sphi 0, %s162
    %s180 = sphi 0, %s180
    %s182 = sphi 0, %s180
    %s183 = sphi 0, %s182
    %s197 = sphi 0, %s183
    %s201 = sphi 0, %s201
    %s203 = sphi 0, %s201
    %s204 = sphi 0, %s203
    %s218 = sphi 0, %s204
    %s224 = sphi 0, %s226
    %s227 = sphi 0, %s224
    %s228 = sphi 0, %s227
    %s244 = sphi 0, %s228
  $region4: #{generator_forward.1} parent=0 // loop_header_branch
    %18 = sbr.rel (%p16) target = $region8
  $region5: #{generator_forward.1} parent=0 // loop_body
    %s20 = ssub.s32 %s15, 1
    %s21 = ssub.s32 %s15, 2
    %s22 = sadd.s32 %s15, 1
    %s23 = ssub.s32 %s15, %s22
    %p24 = scmp.eq.s32.totalorder %s23, 0
    %s26 = sadd.s32 %s25, 1
    %s27 = scalar_select %p24, %s25, %s26
    %p30 = pneg %p24
    %p31 = scmp.eq.s32.totalorder %s15, 7
    %p32 = por %p30, %p31
    %p33 = scmp.ne.s32.totalorder %s25, %s28
    %p34 = scmp.eq.s32.totalorder %s15, 0
    %p35 = por %p33, %p34
    %p36 = scmp.ne.s32.totalorder %s25, %s28
    %p37 = scmp.eq.s32.totalorder %s20, 7
    %p38 = por %p36, %p37
    %p39 = scmp.ne.s32.totalorder %s28, %s29
    %p40 = scmp.eq.s32.totalorder %s20, 0
    %p41 = por %p39, %p40
    %p42 = scmp.ne.s32.totalorder %s28, %s29
    %p43 = scmp.eq.s32.totalorder %s21, 7
    %p44 = por %p42, %p43
    %p46 = scmp.ne.s32.totalorder %s29, %s45
    %p47 = scmp.eq.s32.totalorder %s21, 0
    %p48 = por %p46, %p47
    %s49 = ssub.s32 %s15, %s22
    %p50 = scmp.eq.s32.totalorder %s49, 0
    %s52 = sadd.s32 %s51, 1
    %s53 = scalar_select %p50, %s51, %s52
    %p56 = pneg %p50
    %p57 = scmp.eq.s32.totalorder %s15, 7
    %p58 = por %p56, %p57
    %p59 = scmp.ne.s32.totalorder %s51, %s54
    %p60 = scmp.eq.s32.totalorder %s15, 0
    %p61 = por %p59, %p60
    %p62 = scmp.ne.s32.totalorder %s51, %s54
    %p63 = scmp.eq.s32.totalorder %s20, 7
    %p64 = por %p62, %p63
    %p65 = scmp.ne.s32.totalorder %s54, %s55
    %p66 = scmp.eq.s32.totalorder %s20, 0
    %p67 = por %p65, %p66
    %p68 = scmp.ne.s32.totalorder %s54, %s55
    %p69 = scmp.eq.s32.totalorder %s21, 7
    %p70 = por %p68, %p69
    %p72 = scmp.ne.s32.totalorder %s55, %s71
    %p73 = scmp.eq.s32.totalorder %s21, 0
    %p74 = por %p72, %p73
    %s76 = sadd.s32 %s75, 1
    %p79 = scmp.eq.s32.totalorder %s15, 7
    %p80 = scmp.ne.s32.totalorder %s75, %s77
    %p81 = scmp.eq.s32.totalorder %s15, 0
    %p82 = por %p80, %p81
    %p83 = scmp.ne.s32.totalorder %s75, %s77
    %p84 = scmp.eq.s32.totalorder %s20, 7
    %p85 = por %p83, %p84
    %p86 = scmp.ne.s32.totalorder %s77, %s78
    %p87 = scmp.eq.s32.totalorder %s20, 0
    %p88 = por %p86, %p87
    %p89 = scmp.ne.s32.totalorder %s77, %s78
    %p90 = scmp.eq.s32.totalorder %s21, 7
    %p91 = por %p89, %p90
    %p93 = scmp.ne.s32.totalorder %s78, %s92
    %p94 = scmp.eq.s32.totalorder %s21, 0
    %p95 = por %p93, %p94
    %s97 = sadd.s32 %s96, 1
    %p100 = scmp.eq.s32.totalorder %s15, 7
    %p101 = scmp.ne.s32.totalorder %s96, %s98
    %p102 = scmp.eq.s32.totalorder %s15, 0
    %p103 = por %p101, %p102
    %p104 = scmp.ne.s32.totalorder %s96, %s98
    %p105 = scmp.eq.s32.totalorder %s20, 7
    %p106 = por %p104, %p105
    %p107 = scmp.ne.s32.totalorder %s98, %s99
    %p108 = scmp.eq.s32.totalorder %s20, 0
    %p109 = por %p107, %p108
    %p110 = scmp.ne.s32.totalorder %s98, %s99
    %p111 = scmp.eq.s32.totalorder %s21, 7
    %p112 = por %p110, %p111
    %p114 = scmp.ne.s32.totalorder %s99, %s113
    %p115 = scmp.eq.s32.totalorder %s21, 0
    %p116 = por %p114, %p115
    %s118 = sadd.s32 %s117, 1
    %p121 = scmp.eq.s32.totalorder %s15, 7
    %p122 = scmp.ne.s32.totalorder %s117, %s119
    %p123 = scmp.eq.s32.totalorder %s15, 0
    %p124 = por %p122, %p123
    %p125 = scmp.ne.s32.totalorder %s117, %s119
    %p126 = scmp.eq.s32.totalorder %s20, 7
    %p127 = por %p125, %p126
    %p128 = scmp.ne.s32.totalorder %s119, %s120
    %p129 = scmp.eq.s32.totalorder %s20, 0
    %p130 = por %p128, %p129
    %p131 = scmp.ne.s32.totalorder %s119, %s120
    %p132 = scmp.eq.s32.totalorder %s21, 7
    %p133 = por %p131, %p132
    %p135 = scmp.ne.s32.totalorder %s120, %s134
    %p136 = scmp.eq.s32.totalorder %s21, 0
    %p137 = por %p135, %p136
    %s139 = sadd.s32 %s138, 1
    %p142 = scmp.eq.s32.totalorder %s15, 7
    %p143 = scmp.ne.s32.totalorder %s138, %s140
    %p144 = scmp.eq.s32.totalorder %s15, 0
    %p145 = por %p143, %p144
    %p146 = scmp.ne.s32.totalorder %s138, %s140
    %p147 = scmp.eq.s32.totalorder %s20, 7
    %p148 = por %p146, %p147
    %p149 = scmp.ne.s32.totalorder %s140, %s141
    %p150 = scmp.eq.s32.totalorder %s20, 0
    %p151 = por %p149, %p150
    %p152 = scmp.ne.s32.totalorder %s140, %s141
    %p153 = scmp.eq.s32.totalorder %s21, 7
    %p154 = por %p152, %p153
    %p156 = scmp.ne.s32.totalorder %s141, %s155
    %p157 = scmp.eq.s32.totalorder %s21, 0
    %p158 = por %p156, %p157
    %s160 = sadd.s32 %s159, 1
    %p163 = scmp.eq.s32.totalorder %s15, 7
    %p164 = scmp.ne.s32.totalorder %s159, %s161
    %p165 = scmp.eq.s32.totalorder %s15, 0
    %p166 = por %p164, %p165
    %p167 = scmp.ne.s32.totalorder %s159, %s161
    %p168 = scmp.eq.s32.totalorder %s20, 7
    %p169 = por %p167, %p168
    %p170 = scmp.ne.s32.totalorder %s161, %s162
    %p171 = scmp.eq.s32.totalorder %s20, 0
    %p172 = por %p170, %p171
    %p173 = scmp.ne.s32.totalorder %s161, %s162
    %p174 = scmp.eq.s32.totalorder %s21, 7
    %p175 = por %p173, %p174
    %p177 = scmp.ne.s32.totalorder %s162, %s176
    %p178 = scmp.eq.s32.totalorder %s21, 0
    %p179 = por %p177, %p178
    %s181 = sadd.s32 %s180, 1
    %p184 = scmp.eq.s32.totalorder %s15, 7
    %p185 = scmp.ne.s32.totalorder %s180, %s182
    %p186 = scmp.eq.s32.totalorder %s15, 0
    %p187 = por %p185, %p186
    %p188 = scmp.ne.s32.totalorder %s180, %s182
    %p189 = scmp.eq.s32.totalorder %s20, 7
    %p190 = por %p188, %p189
    %p191 = scmp.ne.s32.totalorder %s182, %s183
    %p192 = scmp.eq.s32.totalorder %s20, 0
    %p193 = por %p191, %p192
    %p194 = scmp.ne.s32.totalorder %s182, %s183
    %p195 = scmp.eq.s32.totalorder %s21, 7
    %p196 = por %p194, %p195
    %p198 = scmp.ne.s32.totalorder %s183, %s197
    %p199 = scmp.eq.s32.totalorder %s21, 0
    %p200 = por %p198, %p199
    %s202 = sadd.s32 %s201, 1
    %p205 = scmp.eq.s32.totalorder %s15, 7
    %p206 = scmp.ne.s32.totalorder %s201, %s203
    %p207 = scmp.eq.s32.totalorder %s15, 0
    %p208 = por %p206, %p207
    %p209 = scmp.ne.s32.totalorder %s201, %s203
    %p210 = scmp.eq.s32.totalorder %s20, 7
    %p211 = por %p209, %p210
    %p212 = scmp.ne.s32.totalorder %s203, %s204
    %p213 = scmp.eq.s32.totalorder %s20, 0
    %p214 = por %p212, %p213
    %p215 = scmp.ne.s32.totalorder %s203, %s204
    %p216 = scmp.eq.s32.totalorder %s21, 7
    %p217 = por %p215, %p216
    %p219 = scmp.ne.s32.totalorder %s204, %s218
    %p220 = scmp.eq.s32.totalorder %s21, 0
    %p221 = por %p219, %p220
    %s222 = ssub.s32 %s15, %s22
    %p223 = scmp.eq.s32.totalorder %s222, 0
    %s225 = sadd.s32 %s224, 1
    %s226 = scalar_select %p223, %s224, %s225
    %p229 = pneg %p223
    %p230 = scmp.eq.s32.totalorder %s15, 7
    %p231 = por %p229, %p230
    %p232 = scmp.ne.s32.totalorder %s224, %s227
    %p233 = scmp.eq.s32.totalorder %s15, 0
    %p234 = por %p232, %p233
    %p235 = scmp.ne.s32.totalorder %s224, %s227
    %p236 = scmp.eq.s32.totalorder %s20, 7
    %p237 = por %p235, %p236
    %p238 = scmp.ne.s32.totalorder %s227, %s228
    %p239 = scmp.eq.s32.totalorder %s20, 0
    %p240 = por %p238, %p239
    %p241 = scmp.ne.s32.totalorder %s227, %s228
    %p242 = scmp.eq.s32.totalorder %s21, 7
    %p243 = por %p241, %p242
    %p245 = scmp.ne.s32.totalorder %s228, %s244
    %p246 = scmp.eq.s32.totalorder %s21, 0
    %p247 = por %p245, %p246
    %p248 = scmp.le.s32.totalorder 1, %s15
    %p249 = scmp.lt.s32.totalorder %s15, 9
    %p250 = pnand %p248, %p249
    %p251 = pneg %p250
    // Predicated region
    $region9: #{generator_forward.1} parent=5 // pred_check
      _
    $region10: #{generator_forward.1} parent=5 // pred_check_branch
      %253 = sbr.rel (%p250) target = $region12
    $region11: #{generator_forward.1} parent=5 // pred_region
      %s254 = ssub.s32 %s15, 1
      // Predicated region
      $region13: #{generator_forward.1} parent=11 // pred_check
        %p255 = pneg %p88
      $region14: #{generator_forward.1} parent=11 // pred_check_branch
        %257 = sbr.rel (%p255) target = $region16
      $region15: #{generator_forward.1} parent=11 // pred_region
        _
      $region16: #{generator_forward.1} parent=11 // pred_fallthru
        _
      // Predicated region
      $region17: #{generator_forward.1} parent=11 // pred_check
        %p258 = pneg %p109
      $region18: #{generator_forward.1} parent=11 // pred_check_branch
        %260 = sbr.rel (%p258) target = $region20
      $region19: #{generator_forward.1} parent=11 // pred_region
        _
      $region20: #{generator_forward.1} parent=11 // pred_fallthru
        _
      // Predicated region
      $region21: #{generator_forward.1} parent=11 // pred_check
        %p261 = pneg %p130
      $region22: #{generator_forward.1} parent=11 // pred_check_branch
        %263 = sbr.rel (%p261) target = $region24
      $region23: #{generator_forward.1} parent=11 // pred_region
        _
      $region24: #{generator_forward.1} parent=11 // pred_fallthru
        _
      // Predicated region
      $region25: #{generator_forward.1} parent=11 // pred_check
        %p264 = pneg %p151
      $region26: #{generator_forward.1} parent=11 // pred_check_branch
        %266 = sbr.rel (%p264) target = $region28
      $region27: #{generator_forward.1} parent=11 // pred_region
        _
      $region28: #{generator_forward.1} parent=11 // pred_fallthru
        _
      // Predicated region
      $region29: #{generator_forward.1} parent=11 // pred_check
        %p267 = pneg %p172
      $region30: #{generator_forward.1} parent=11 // pred_check_branch
        %269 = sbr.rel (%p267) target = $region32
      $region31: #{generator_forward.1} parent=11 // pred_region
        _
      $region32: #{generator_forward.1} parent=11 // pred_fallthru
        _
      // Predicated region
      $region33: #{generator_forward.1} parent=11 // pred_check
        %p270 = pneg %p193
      $region34: #{generator_forward.1} parent=11 // pred_check_branch
        %272 = sbr.rel (%p270) target = $region36
      $region35: #{generator_forward.1} parent=11 // pred_region
        _
      $region36: #{generator_forward.1} parent=11 // pred_fallthru
        _
      // Predicated region
      $region37: #{generator_forward.1} parent=11 // pred_check
        %p273 = pneg %p214
      $region38: #{generator_forward.1} parent=11 // pred_check_branch
        %275 = sbr.rel (%p273) target = $region40
      $region39: #{generator_forward.1} parent=11 // pred_region
        _
      $region40: #{generator_forward.1} parent=11 // pred_fallthru
        _
    $region12: #{generator_forward.1} parent=5 // pred_fallthru
      _
    %p276 = scmp.lt.s32.totalorder %s15, 8
    // Predicated region
    $region41: #{generator_forward.1} parent=5 // pred_check
      %p277 = pneg %p276
    $region42: #{generator_forward.1} parent=5 // pred_check_branch
      %279 = sbr.rel (%p277) target = $region44
    $region43: #{generator_forward.1} parent=5 // pred_region
      // Predicated region
      $region45: #{generator_forward.1} parent=43 // pred_check
        %p280 = pneg %p35
      $region46: #{generator_forward.1} parent=43 // pred_check_branch
        %282 = sbr.rel (%p280) target = $region48
      $region47: #{generator_forward.1} parent=43 // pred_region
        %p283 = scmp.lt.s32.totalorder %s15, 7
        %s284 = scalar_select %p283, %s15, 7
        %s285 = smul.addr %s284, 8
        %s286 = scalar_lea.vmem %s0, %s285
      $region48: #{generator_forward.1} parent=43 // pred_fallthru
        _
      // Predicated region
      $region49: #{generator_forward.1} parent=43 // pred_check
        %p287 = pneg %p61
      $region50: #{generator_forward.1} parent=43 // pred_check_branch
        %289 = sbr.rel (%p287) target = $region52
      $region51: #{generator_forward.1} parent=43 // pred_region
        %p290 = scmp.lt.s32.totalorder %s15, 7
        %s291 = scalar_select %p290, %s15, 7
        %s292 = smul.addr %s291, 8
        %s293 = scalar_lea.vmem %s1, %s292
      $region52: #{generator_forward.1} parent=43 // pred_fallthru
        _
    $region44: #{generator_forward.1} parent=5 // pred_fallthru
      _
    %p294 = scmp.le.s32.totalorder 1, %s15
    %p295 = scmp.lt.s32.totalorder %s15, 9
    %p296 = pnand %p294, %p295
    %p297 = pneg %p296
    // Predicated region
    $region53: #{generator_forward.1} parent=5 // pred_check
      _
    $region54: #{generator_forward.1} parent=5 // pred_check_branch
      %299 = sbr.rel (%p296) target = $region56
    $region55: #{generator_forward.1} parent=5 // pred_region
      %s300 = ssub.s32 %s15, 1
      %p301 = scmp.lt.s32.totalorder %s20, 7
      %s302 = scalar_select %p301, %s20, 7
      %s303 = smul.addr %s302, 8
      %s304 = scalar_lea.vmem %s0, %s303
      %p305 = pneg %p41
      %p306 = pneg %p38
      %p307 = scmp.lt.s32.totalorder %s20, 7
      %s308 = scalar_select %p307, %s20, 7
      %s309 = smul.addr %s308, 8
      %s310 = scalar_lea.vmem %s1, %s309
      %p311 = pneg %p67
      %p312 = pneg %p64
      %p313 = pneg %p88
      %p314 = pneg %p85
      %p315 = pneg %p109
      %p316 = pneg %p106
      %p317 = pneg %p130
      %p318 = pneg %p127
      %p319 = pneg %p151
      %p320 = pneg %p148
      %p321 = pneg %p172
      %p322 = pneg %p169
      %p323 = pneg %p193
      %p324 = pneg %p190
      %p325 = pneg %p214
      %p326 = pneg %p211
      %p327 = pneg %p240
      %p328 = pneg %p237
      %p329 = scmp.lt.s32.totalorder %s20, 7
      %s330 = scalar_select %p329, %s20, 7
      %s331 = smul.addr %s330, 8
      %s332 = scalar_lea.vmem %s9, %s331
      %p333 = scmp.lt.s32.totalorder %s20, 7
      %s334 = scalar_select %p333, %s20, 7
      %s335 = smul.addr %s334, 8
      %s336 = scalar_lea.vmem %s0, %s335
      %p337 = scmp.lt.s32.totalorder %s20, 7
      %s338 = scalar_select %p337, %s20, 7
      %s339 = smul.addr %s338, 8
      %s340 = scalar_lea.vmem %s1, %s339
      %p341 = scmp.lt.s32.totalorder %s20, 7
      %s342 = scalar_select %p341, %s20, 7
      %s343 = smul.addr %s342, 8
      %s344 = scalar_lea.vmem %s9, %s343
      %v345 = vld [vmem:[%s336] sm:$0xff]
      %v346 = vld [vmem:[%s340] sm:$0xff]
      %v347 = vld [vmem:[%s2] sm:$0xff]
      %v348 = vld [vmem:[%s2 + $0x8] sm:$0xff]
      %v349 = vld [vmem:[%s2 + $0x10] sm:$0xff]
      %v350 = vld [vmem:[%s3] sm:$0xff]
      %vm351 = vcmask 64512
      %v353 = vsel %vm351, %v346, 0
      %355 = vmatprep.subr.mxu0 0.0
      %356 = vmatpush1.msra.mxu0 0.0
      %357 = vmatprep.subr.mxu0 0.0
      %358 = vmatpush1.msra.mxu0 0.0
      %359 = vmatprep.subr.mxu0 0.0
      %360 = vmatpush1.msra.mxu0 0.0
      %361 = vmatprep.subr.mxu0 0.0
      %362 = vmatpush1.msra.mxu0 0.0
      %363 = vmatprep.subr.mxu0 0.0
      %364 = vmatpush1.msra.mxu0 0.0
      %365 = vmatprep.subr.mxu0 0.0
      %366 = vmatpush1.msra.mxu0 0.0
      %367 = vmatprep.subr.mxu0 0.0
      %368 = vmatpush1.msra.mxu0 0.0
      %369 = vmatprep.subr.mxu0 0.0
      %370 = vmatpush1.msra.mxu0 0.0
      %371 = vmatprep.subr.mxu0 0.0
      %372 = vmatpush1.msra.mxu0 0.0
      %373 = vmatprep.subr.mxu0 0.0
      %374 = vmatpush1.msra.mxu0 0.0
      %375 = vmatprep.subr.mxu0 0.0
      %376 = vmatpush1.msra.mxu0 0.0
      %377 = vmatprep.subr.mxu0 0.0
      %378 = vmatpush1.msra.mxu0 0.0
      %379 = vmatprep.subr.mxu0 0.0
      %380 = vmatpush1.msra.mxu0 0.0
      %381 = vmatprep.subr.mxu0 0.0
      %382 = vmatpush1.msra.mxu0 0.0
      %383 = vmatprep.subr.mxu0 0.0
      %384 = vmatpush1.msra.mxu0 0.0
      %385 = vmatprep.subr.mxu0 0.0
      %v386 = vand.u32 %v350, 4294901760
      %387 = vmatpush1.msra.mxu0 %v386
      %388 = vmatprep.subr.mxu0 0.0
      %389 = vmatpush2.msra.mxu0 0.0
      %390 = vmatprep.subr.mxu0 0.0
      %391 = vmatpush2.msra.mxu0 0.0
      %392 = vmatprep.subr.mxu0 0.0
      %393 = vmatpush2.msra.mxu0 0.0
      %394 = vmatprep.subr.mxu0 0.0
      %395 = vmatpush2.msra.mxu0 0.0
      %396 = vmatprep.subr.mxu0 0.0
      %397 = vmatpush2.msra.mxu0 0.0
      %398 = vmatprep.subr.mxu0 0.0
      %399 = vmatpush2.msra.mxu0 0.0
      %400 = vmatprep.subr.mxu0 0.0
      %401 = vmatpush2.msra.mxu0 0.0
      %402 = vmatprep.subr.mxu0 0.0
      %403 = vmatpush2.msra.mxu0 0.0
      %404 = vmatprep.subr.mxu0 0.0
      %405 = vmatpush2.msra.mxu0 0.0
      %406 = vmatprep.subr.mxu0 0.0
      %407 = vmatpush2.msra.mxu0 0.0
      %408 = vmatprep.subr.mxu0 0.0
      %409 = vmatpush2.msra.mxu0 0.0
      %410 = vmatprep.subr.mxu0 0.0
      %411 = vmatpush2.msra.mxu0 0.0
      %412 = vmatprep.subr.mxu0 0.0
      %413 = vmatpush2.msra.mxu0 0.0
      %414 = vmatprep.subr.mxu0 0.0
      %415 = vmatpush2.msra.mxu0 0.0
      %416 = vmatprep.subr.mxu0 0.0
      %417 = vmatpush2.msra.mxu0 0.0
      %418 = vmatprep.subr.mxu0 0.0
      %419 = vmatpush2.msra.mxu0 0.0
      %420 = vmatprep.mubr.f32.mxu0 0.0
      %v421 = vand.u32 %v353, 4294901760
      %v422 = vsub.f32 %v353, %v421
      %v423 = vand.u32 %v422, 4294901760
      %v424 = vsub.f32 %v422, %v423
      %v425 = vand.u32 %v424, 4294901760
      %426 = vmatmul.mubr.f32.gmra.mxu0 %v425
      %v427 = vpop.f32.mrf.mxu0
      %v428 = vadd.f32 0.0, %v427
      %v429 = vpop.f32.mrf.mxu0
      %430 = vdwg.mxu0
      %431 = vmatprep.subr.mxu0 0.0
      %432 = vmatpush1.msra.mxu0 0.0
      %433 = vmatprep.subr.mxu0 0.0
      %434 = vmatpush1.msra.mxu0 0.0
      %435 = vmatprep.subr.mxu0 0.0
      %436 = vmatpush1.msra.mxu0 0.0
      %437 = vmatprep.subr.mxu0 0.0
      %438 = vmatpush1.msra.mxu0 0.0
      %439 = vmatprep.subr.mxu0 0.0
      %440 = vmatpush1.msra.mxu0 0.0
      %441 = vmatprep.subr.mxu0 0.0
      %442 = vmatpush1.msra.mxu0 0.0
      %443 = vmatprep.subr.mxu0 0.0
      %444 = vmatpush1.msra.mxu0 0.0
      %445 = vmatprep.subr.mxu0 0.0
      %446 = vmatpush1.msra.mxu0 0.0
      %447 = vmatprep.subr.mxu0 0.0
      %448 = vmatpush1.msra.mxu0 0.0
      %449 = vmatprep.subr.mxu0 0.0
      %450 = vmatpush1.msra.mxu0 0.0
      %451 = vmatprep.subr.mxu0 0.0
      %452 = vmatpush1.msra.mxu0 0.0
      %453 = vmatprep.subr.mxu0 0.0
      %454 = vmatpush1.msra.mxu0 0.0
      %455 = vmatprep.subr.mxu0 0.0
      %456 = vmatpush1.msra.mxu0 0.0
      %457 = vmatprep.subr.mxu0 0.0
      %458 = vmatpush1.msra.mxu0 0.0
      %459 = vmatprep.subr.mxu0 0.0
      %460 = vmatpush1.msra.mxu0 0.0
      %461 = vmatprep.subr.mxu0 0.0
      %v462 = vand.u32 %v350, 4294901760
      %v463 = vsub.f32 %v350, %v462
      %v464 = vand.u32 %v463, 4294901760
      %v465 = vsub.f32 %v463, %v464
      %v466 = vand.u32 %v465, 4294901760
      %467 = vmatpush1.msra.mxu0 %v466
      %468 = vmatprep.subr.mxu0 0.0
      %469 = vmatpush2.msra.mxu0 0.0
      %470 = vmatprep.subr.mxu0 0.0
      %471 = vmatpush2.msra.mxu0 0.0
      %472 = vmatprep.subr.mxu0 0.0
      %473 = vmatpush2.msra.mxu0 0.0
      %474 = vmatprep.subr.mxu0 0.0
      %475 = vmatpush2.msra.mxu0 0.0
      %476 = vmatprep.subr.mxu0 0.0
      %477 = vmatpush2.msra.mxu0 0.0
      %478 = vmatprep.subr.mxu0 0.0
      %479 = vmatpush2.msra.mxu0 0.0
      %480 = vmatprep.subr.mxu0 0.0
      %481 = vmatpush2.msra.mxu0 0.0
      %482 = vmatprep.subr.mxu0 0.0
      %483 = vmatpush2.msra.mxu0 0.0
      %484 = vmatprep.subr.mxu0 0.0
      %485 = vmatpush2.msra.mxu0 0.0
      %486 = vmatprep.subr.mxu0 0.0
      %487 = vmatpush2.msra.mxu0 0.0
      %488 = vmatprep.subr.mxu0 0.0
      %489 = vmatpush2.msra.mxu0 0.0
      %490 = vmatprep.subr.mxu0 0.0
      %491 = vmatpush2.msra.mxu0 0.0
      %492 = vmatprep.subr.mxu0 0.0
      %493 = vmatpush2.msra.mxu0 0.0
      %494 = vmatprep.subr.mxu0 0.0
      %495 = vmatpush2.msra.mxu0 0.0
      %496 = vmatprep.subr.mxu0 0.0
      %497 = vmatpush2.msra.mxu0 0.0
      %498 = vmatprep.subr.mxu0 0.0
      %499 = vmatpush2.msra.mxu0 0.0
      %500 = vmatprep.mubr.f32.mxu0 0.0
      %v501 = vand.u32 %v353, 4294901760
      %502 = vmatmul.mubr.f32.gmra.mxu0 %v501
      %v503 = vpop.f32.mrf.mxu0
      %v504 = vadd.f32 %v428, %v503
      %v505 = vpop.f32.mrf.mxu0
      %506 = vdwg.mxu0
      %507 = vmatprep.subr.mxu0 0.0
      %508 = vmatpush1.msra.mxu0 0.0
      %509 = vmatprep.subr.mxu0 0.0
      %510 = vmatpush1.msra.mxu0 0.0
      %511 = vmatprep.subr.mxu0 0.0
      %512 = vmatpush1.msra.mxu0 0.0
      %513 = vmatprep.subr.mxu0 0.0
      %514 = vmatpush1.msra.mxu0 0.0
      %515 = vmatprep.subr.mxu0 0.0
      %516 = vmatpush1.msra.mxu0 0.0
      %517 = vmatprep.subr.mxu0 0.0
      %518 = vmatpush1.msra.mxu0 0.0
      %519 = vmatprep.subr.mxu0 0.0
      %520 = vmatpush1.msra.mxu0 0.0
      %521 = vmatprep.subr.mxu0 0.0
      %522 = vmatpush1.msra.mxu0 0.0
      %523 = vmatprep.subr.mxu0 0.0
      %524 = vmatpush1.msra.mxu0 0.0
      %525 = vmatprep.subr.mxu0 0.0
      %526 = vmatpush1.msra.mxu0 0.0
      %527 = vmatprep.subr.mxu0 0.0
      %528 = vmatpush1.msra.mxu0 0.0
      %529 = vmatprep.subr.mxu0 0.0
      %530 = vmatpush1.msra.mxu0 0.0
      %531 = vmatprep.subr.mxu0 0.0
      %532 = vmatpush1.msra.mxu0 0.0
      %533 = vmatprep.subr.mxu0 0.0
      %534 = vmatpush1.msra.mxu0 0.0
      %535 = vmatprep.subr.mxu0 0.0
      %536 = vmatpush1.msra.mxu0 0.0
      %537 = vmatprep.subr.mxu0 0.0
      %v538 = vand.u32 %v350, 4294901760
      %v539 = vsub.f32 %v350, %v538
      %540 = vmatpush1.msra.mxu0 %v539
      %541 = vmatprep.subr.mxu0 0.0
      %542 = vmatpush2.msra.mxu0 0.0
      %543 = vmatprep.subr.mxu0 0.0
      %544 = vmatpush2.msra.mxu0 0.0
      %545 = vmatprep.subr.mxu0 0.0
      %546 = vmatpush2.msra.mxu0 0.0
      %547 = vmatprep.subr.mxu0 0.0
      %548 = vmatpush2.msra.mxu0 0.0
      %549 = vmatprep.subr.mxu0 0.0
      %550 = vmatpush2.msra.mxu0 0.0
      %551 = vmatprep.subr.mxu0 0.0
      %552 = vmatpush2.msra.mxu0 0.0
      %553 = vmatprep.subr.mxu0 0.0
      %554 = vmatpush2.msra.mxu0 0.0
      %555 = vmatprep.subr.mxu0 0.0
      %556 = vmatpush2.msra.mxu0 0.0
      %557 = vmatprep.subr.mxu0 0.0
      %558 = vmatpush2.msra.mxu0 0.0
      %559 = vmatprep.subr.mxu0 0.0
      %560 = vmatpush2.msra.mxu0 0.0
      %561 = vmatprep.subr.mxu0 0.0
      %562 = vmatpush2.msra.mxu0 0.0
      %563 = vmatprep.subr.mxu0 0.0
      %564 = vmatpush2.msra.mxu0 0.0
      %565 = vmatprep.subr.mxu0 0.0
      %566 = vmatpush2.msra.mxu0 0.0
      %567 = vmatprep.subr.mxu0 0.0
      %568 = vmatpush2.msra.mxu0 0.0
      %569 = vmatprep.subr.mxu0 0.0
      %570 = vmatpush2.msra.mxu0 0.0
      %571 = vmatprep.subr.mxu0 0.0
      %572 = vmatpush2.msra.mxu0 0.0
      %573 = vmatprep.mubr.f32.mxu0 0.0
      %v574 = vand.u32 %v353, 4294901760
      %v575 = vsub.f32 %v353, %v574
      %576 = vmatmul.mubr.f32.gmra.mxu0 %v575
      %v577 = vpop.f32.mrf.mxu0
      %v578 = vadd.f32 %v504, %v577
      %v579 = vpop.f32.mrf.mxu0
      %580 = vdwg.mxu0
      %581 = vmatprep.subr.mxu0 0.0
      %582 = vmatpush1.msra.mxu0 0.0
      %583 = vmatprep.subr.mxu0 0.0
      %584 = vmatpush1.msra.mxu0 0.0
      %585 = vmatprep.subr.mxu0 0.0
      %586 = vmatpush1.msra.mxu0 0.0
      %587 = vmatprep.subr.mxu0 0.0
      %588 = vmatpush1.msra.mxu0 0.0
      %589 = vmatprep.subr.mxu0 0.0
      %590 = vmatpush1.msra.mxu0 0.0
      %591 = vmatprep.subr.mxu0 0.0
      %592 = vmatpush1.msra.mxu0 0.0
      %593 = vmatprep.subr.mxu0 0.0
      %594 = vmatpush1.msra.mxu0 0.0
      %595 = vmatprep.subr.mxu0 0.0
      %596 = vmatpush1.msra.mxu0 0.0
      %597 = vmatprep.subr.mxu0 0.0
      %598 = vmatpush1.msra.mxu0 0.0
      %599 = vmatprep.subr.mxu0 0.0
      %600 = vmatpush1.msra.mxu0 0.0
      %601 = vmatprep.subr.mxu0 0.0
      %602 = vmatpush1.msra.mxu0 0.0
      %603 = vmatprep.subr.mxu0 0.0
      %604 = vmatpush1.msra.mxu0 0.0
      %605 = vmatprep.subr.mxu0 0.0
      %606 = vmatpush1.msra.mxu0 0.0
      %607 = vmatprep.subr.mxu0 0.0
      %608 = vmatpush1.msra.mxu0 0.0
      %609 = vmatprep.subr.mxu0 0.0
      %610 = vmatpush1.msra.mxu0 0.0
      %611 = vmatprep.subr.mxu0 0.0
      %v612 = vand.u32 %v350, 4294901760
      %613 = vmatpush1.msra.mxu0 %v612
      %614 = vmatprep.subr.mxu0 0.0
      %615 = vmatpush2.msra.mxu0 0.0
      %616 = vmatprep.subr.mxu0 0.0
      %617 = vmatpush2.msra.mxu0 0.0
      %618 = vmatprep.subr.mxu0 0.0
      %619 = vmatpush2.msra.mxu0 0.0
      %620 = vmatprep.subr.mxu0 0.0
      %621 = vmatpush2.msra.mxu0 0.0
      %622 = vmatprep.subr.mxu0 0.0
      %623 = vmatpush2.msra.mxu0 0.0
      %624 = vmatprep.subr.mxu0 0.0
      %625 = vmatpush2.msra.mxu0 0.0
      %626 = vmatprep.subr.mxu0 0.0
      %627 = vmatpush2.msra.mxu0 0.0
      %628 = vmatprep.subr.mxu0 0.0
      %629 = vmatpush2.msra.mxu0 0.0
      %630 = vmatprep.subr.mxu0 0.0
      %631 = vmatpush2.msra.mxu0 0.0
      %632 = vmatprep.subr.mxu0 0.0
      %633 = vmatpush2.msra.mxu0 0.0
      %634 = vmatprep.subr.mxu0 0.0
      %635 = vmatpush2.msra.mxu0 0.0
      %636 = vmatprep.subr.mxu0 0.0
      %637 = vmatpush2.msra.mxu0 0.0
      %638 = vmatprep.subr.mxu0 0.0
      %639 = vmatpush2.msra.mxu0 0.0
      %640 = vmatprep.subr.mxu0 0.0
      %641 = vmatpush2.msra.mxu0 0.0
      %642 = vmatprep.subr.mxu0 0.0
      %643 = vmatpush2.msra.mxu0 0.0
      %644 = vmatprep.subr.mxu0 0.0
      %645 = vmatpush2.msra.mxu0 0.0
      %646 = vmatprep.mubr.f32.mxu0 0.0
      %v647 = vand.u32 %v353, 4294901760
      %v648 = vsub.f32 %v353, %v647
      %v649 = vand.u32 %v648, 4294901760
      %650 = vmatmul.mubr.f32.gmra.mxu0 %v649
      %v651 = vpop.f32.mrf.mxu0
      %v652 = vadd.f32 %v578, %v651
      %v653 = vpop.f32.mrf.mxu0
      %654 = vdwg.mxu0
      %655 = vmatprep.subr.mxu0 0.0
      %656 = vmatpush1.msra.mxu0 0.0
      %657 = vmatprep.subr.mxu0 0.0
      %658 = vmatpush1.msra.mxu0 0.0
      %659 = vmatprep.subr.mxu0 0.0
      %660 = vmatpush1.msra.mxu0 0.0
      %661 = vmatprep.subr.mxu0 0.0
      %662 = vmatpush1.msra.mxu0 0.0
      %663 = vmatprep.subr.mxu0 0.0
      %664 = vmatpush1.msra.mxu0 0.0
      %665 = vmatprep.subr.mxu0 0.0
      %666 = vmatpush1.msra.mxu0 0.0
      %667 = vmatprep.subr.mxu0 0.0
      %668 = vmatpush1.msra.mxu0 0.0
      %669 = vmatprep.subr.mxu0 0.0
      %670 = vmatpush1.msra.mxu0 0.0
      %671 = vmatprep.subr.mxu0 0.0
      %672 = vmatpush1.msra.mxu0 0.0
      %673 = vmatprep.subr.mxu0 0.0
      %674 = vmatpush1.msra.mxu0 0.0
      %675 = vmatprep.subr.mxu0 0.0
      %676 = vmatpush1.msra.mxu0 0.0
      %677 = vmatprep.subr.mxu0 0.0
      %678 = vmatpush1.msra.mxu0 0.0
      %679 = vmatprep.subr.mxu0 0.0
      %680 = vmatpush1.msra.mxu0 0.0
      %681 = vmatprep.subr.mxu0 0.0
      %682 = vmatpush1.msra.mxu0 0.0
      %683 = vmatprep.subr.mxu0 0.0
      %684 = vmatpush1.msra.mxu0 0.0
      %685 = vmatprep.subr.mxu0 0.0
      %v686 = vand.u32 %v350, 4294901760
      %v687 = vsub.f32 %v350, %v686
      %v688 = vand.u32 %v687, 4294901760
      %689 = vmatpush1.msra.mxu0 %v688
      %690 = vmatprep.subr.mxu0 0.0
      %691 = vmatpush2.msra.mxu0 0.0
      %692 = vmatprep.subr.mxu0 0.0
      %693 = vmatpush2.msra.mxu0 0.0
      %694 = vmatprep.subr.mxu0 0.0
      %695 = vmatpush2.msra.mxu0 0.0
      %696 = vmatprep.subr.mxu0 0.0
      %697 = vmatpush2.msra.mxu0 0.0
      %698 = vmatprep.subr.mxu0 0.0
      %699 = vmatpush2.msra.mxu0 0.0
      %700 = vmatprep.subr.mxu0 0.0
      %701 = vmatpush2.msra.mxu0 0.0
      %702 = vmatprep.subr.mxu0 0.0
      %703 = vmatpush2.msra.mxu0 0.0
      %704 = vmatprep.subr.mxu0 0.0
      %705 = vmatpush2.msra.mxu0 0.0
      %706 = vmatprep.subr.mxu0 0.0
      %707 = vmatpush2.msra.mxu0 0.0
      %708 = vmatprep.subr.mxu0 0.0
      %709 = vmatpush2.msra.mxu0 0.0
      %710 = vmatprep.subr.mxu0 0.0
      %711 = vmatpush2.msra.mxu0 0.0
      %712 = vmatprep.subr.mxu0 0.0
      %713 = vmatpush2.msra.mxu0 0.0
      %714 = vmatprep.subr.mxu0 0.0
      %715 = vmatpush2.msra.mxu0 0.0
      %716 = vmatprep.subr.mxu0 0.0
      %717 = vmatpush2.msra.mxu0 0.0
      %718 = vmatprep.subr.mxu0 0.0
      %719 = vmatpush2.msra.mxu0 0.0
      %720 = vmatprep.subr.mxu0 0.0
      %721 = vmatpush2.msra.mxu0 0.0
      %722 = vmatprep.mubr.f32.mxu0 0.0
      %v723 = vand.u32 %v353, 4294901760
      %724 = vmatmul.mubr.f32.gmra.mxu0 %v723
      %v725 = vpop.f32.mrf.mxu0
      %v726 = vadd.f32 %v652, %v725
      %v727 = vpop.f32.mrf.mxu0
      %728 = vdwg.mxu0
      %729 = vmatprep.subr.mxu0 0.0
      %730 = vmatpush1.msra.mxu0 0.0
      %731 = vmatprep.subr.mxu0 0.0
      %732 = vmatpush1.msra.mxu0 0.0
      %733 = vmatprep.subr.mxu0 0.0
      %734 = vmatpush1.msra.mxu0 0.0
      %735 = vmatprep.subr.mxu0 0.0
      %736 = vmatpush1.msra.mxu0 0.0
      %737 = vmatprep.subr.mxu0 0.0
      %738 = vmatpush1.msra.mxu0 0.0
      %739 = vmatprep.subr.mxu0 0.0
      %740 = vmatpush1.msra.mxu0 0.0
      %741 = vmatprep.subr.mxu0 0.0
      %742 = vmatpush1.msra.mxu0 0.0
      %743 = vmatprep.subr.mxu0 0.0
      %744 = vmatpush1.msra.mxu0 0.0
      %745 = vmatprep.subr.mxu0 0.0
      %746 = vmatpush1.msra.mxu0 0.0
      %747 = vmatprep.subr.mxu0 0.0
      %748 = vmatpush1.msra.mxu0 0.0
      %749 = vmatprep.subr.mxu0 0.0
      %750 = vmatpush1.msra.mxu0 0.0
      %751 = vmatprep.subr.mxu0 0.0
      %752 = vmatpush1.msra.mxu0 0.0
      %753 = vmatprep.subr.mxu0 0.0
      %754 = vmatpush1.msra.mxu0 0.0
      %755 = vmatprep.subr.mxu0 0.0
      %756 = vmatpush1.msra.mxu0 0.0
      %757 = vmatprep.subr.mxu0 0.0
      %758 = vmatpush1.msra.mxu0 0.0
      %759 = vmatprep.subr.mxu0 0.0
      %v760 = vand.u32 %v350, 4294901760
      %761 = vmatpush1.msra.mxu0 %v760
      %762 = vmatprep.subr.mxu0 0.0
      %763 = vmatpush2.msra.mxu0 0.0
      %764 = vmatprep.subr.mxu0 0.0
      %765 = vmatpush2.msra.mxu0 0.0
      %766 = vmatprep.subr.mxu0 0.0
      %767 = vmatpush2.msra.mxu0 0.0
      %768 = vmatprep.subr.mxu0 0.0
      %769 = vmatpush2.msra.mxu0 0.0
      %770 = vmatprep.subr.mxu0 0.0
      %771 = vmatpush2.msra.mxu0 0.0
      %772 = vmatprep.subr.mxu0 0.0
      %773 = vmatpush2.msra.mxu0 0.0
      %774 = vmatprep.subr.mxu0 0.0
      %775 = vmatpush2.msra.mxu0 0.0
      %776 = vmatprep.subr.mxu0 0.0
      %777 = vmatpush2.msra.mxu0 0.0
      %778 = vmatprep.subr.mxu0 0.0
      %779 = vmatpush2.msra.mxu0 0.0
      %780 = vmatprep.subr.mxu0 0.0
      %781 = vmatpush2.msra.mxu0 0.0
      %782 = vmatprep.subr.mxu0 0.0
      %783 = vmatpush2.msra.mxu0 0.0
      %784 = vmatprep.subr.mxu0 0.0
      %785 = vmatpush2.msra.mxu0 0.0
      %786 = vmatprep.subr.mxu0 0.0
      %787 = vmatpush2.msra.mxu0 0.0
      %788 = vmatprep.subr.mxu0 0.0
      %789 = vmatpush2.msra.mxu0 0.0
      %790 = vmatprep.subr.mxu0 0.0
      %791 = vmatpush2.msra.mxu0 0.0
      %792 = vmatprep.subr.mxu0 0.0
      %793 = vmatpush2.msra.mxu0 0.0
      %794 = vmatprep.mubr.f32.mxu0 0.0
      %v795 = vand.u32 %v353, 4294901760
      %796 = vmatmul.mubr.f32.gmra.mxu0 %v795
      %v797 = vpop.f32.mrf.mxu0
      %v798 = vadd.f32 %v726, %v797
      %v799 = vpop.f32.mrf.mxu0
      %800 = vdwg.mxu0
      %vm801 = vcmask 195584
      %v803 = vsel %vm801, %v345, 0
      %805 = vmatprep.subr.mxu0 0.0
      %806 = vmatpush1.msra.mxu0 0.0
      %807 = vmatprep.subr.mxu0 0.0
      %808 = vmatpush1.msra.mxu0 0.0
      %809 = vmatprep.subr.mxu0 0.0
      %810 = vmatpush1.msra.mxu0 0.0
      %811 = vmatprep.subr.mxu0 0.0
      %812 = vmatpush1.msra.mxu0 0.0
      %813 = vmatprep.subr.mxu0 0.0
      %814 = vmatpush1.msra.mxu0 0.0
      %815 = vmatprep.subr.mxu0 0.0
      %816 = vmatpush1.msra.mxu0 0.0
      %817 = vmatprep.subr.mxu0 0.0
      %818 = vmatpush1.msra.mxu0 0.0
      %819 = vmatprep.subr.mxu0 0.0
      %820 = vmatpush1.msra.mxu0 0.0
      %821 = vmatprep.subr.mxu0 0.0
      %822 = vmatpush1.msra.mxu0 0.0
      %823 = vmatprep.subr.mxu0 0.0
      %824 = vmatpush1.msra.mxu0 0.0
      %825 = vmatprep.subr.mxu0 0.0
      %826 = vmatpush1.msra.mxu0 0.0
      %827 = vmatprep.subr.mxu0 0.0
      %828 = vmatpush1.msra.mxu0 0.0
      %829 = vmatprep.subr.mxu0 0.0
      %830 = vmatpush1.msra.mxu0 0.0
      %831 = vmatprep.subr.mxu0 0.0
      %v832 = vand.u32 %v349, 4294901760
      %833 = vmatpush1.msra.mxu0 %v832
      %834 = vmatprep.subr.mxu0 0.0
      %v835 = vand.u32 %v348, 4294901760
      %836 = vmatpush1.msra.mxu0 %v835
      %837 = vmatprep.subr.mxu0 0.0
      %v838 = vand.u32 %v347, 4294901760
      %839 = vmatpush1.msra.mxu0 %v838
      %840 = vmatprep.subr.mxu0 0.0
      %841 = vmatpush2.msra.mxu0 0.0
      %842 = vmatprep.subr.mxu0 0.0
      %843 = vmatpush2.msra.mxu0 0.0
      %844 = vmatprep.subr.mxu0 0.0
      %845 = vmatpush2.msra.mxu0 0.0
      %846 = vmatprep.subr.mxu0 0.0
      %847 = vmatpush2.msra.mxu0 0.0
      %848 = vmatprep.subr.mxu0 0.0
      %849 = vmatpush2.msra.mxu0 0.0
      %850 = vmatprep.subr.mxu0 0.0
      %851 = vmatpush2.msra.mxu0 0.0
      %852 = vmatprep.subr.mxu0 0.0
      %853 = vmatpush2.msra.mxu0 0.0
      %854 = vmatprep.subr.mxu0 0.0
      %855 = vmatpush2.msra.mxu0 0.0
      %856 = vmatprep.subr.mxu0 0.0
      %857 = vmatpush2.msra.mxu0 0.0
      %858 = vmatprep.subr.mxu0 0.0
      %859 = vmatpush2.msra.mxu0 0.0
      %860 = vmatprep.subr.mxu0 0.0
      %861 = vmatpush2.msra.mxu0 0.0
      %862 = vmatprep.subr.mxu0 0.0
      %863 = vmatpush2.msra.mxu0 0.0
      %864 = vmatprep.subr.mxu0 0.0
      %865 = vmatpush2.msra.mxu0 0.0
      %866 = vmatprep.subr.mxu0 0.0
      %867 = vmatpush2.msra.mxu0 0.0
      %868 = vmatprep.subr.mxu0 0.0
      %869 = vmatpush2.msra.mxu0 0.0
      %870 = vmatprep.subr.mxu0 0.0
      %871 = vmatpush2.msra.mxu0 0.0
      %872 = vmatprep.mubr.f32.mxu0 0.0
      %v873 = vand.u32 %v803, 4294901760
      %v874 = vsub.f32 %v803, %v873
      %v875 = vand.u32 %v874, 4294901760
      %v876 = vsub.f32 %v874, %v875
      %v877 = vand.u32 %v876, 4294901760
      %878 = vmatmul.mubr.f32.gmra.mxu0 %v877
      %v879 = vpop.f32.mrf.mxu0
      %v880 = vadd.f32 %v798, %v879
      %v881 = vpop.f32.mrf.mxu0
      %882 = vdwg.mxu0
      %883 = vmatprep.subr.mxu0 0.0
      %884 = vmatpush1.msra.mxu0 0.0
      %885 = vmatprep.subr.mxu0 0.0
      %886 = vmatpush1.msra.mxu0 0.0
      %887 = vmatprep.subr.mxu0 0.0
      %888 = vmatpush1.msra.mxu0 0.0
      %889 = vmatprep.subr.mxu0 0.0
      %890 = vmatpush1.msra.mxu0 0.0
      %891 = vmatprep.subr.mxu0 0.0
      %892 = vmatpush1.msra.mxu0 0.0
      %893 = vmatprep.subr.mxu0 0.0
      %894 = vmatpush1.msra.mxu0 0.0
      %895 = vmatprep.subr.mxu0 0.0
      %896 = vmatpush1.msra.mxu0 0.0
      %897 = vmatprep.subr.mxu0 0.0
      %898 = vmatpush1.msra.mxu0 0.0
      %899 = vmatprep.subr.mxu0 0.0
      %900 = vmatpush1.msra.mxu0 0.0
      %901 = vmatprep.subr.mxu0 0.0
      %902 = vmatpush1.msra.mxu0 0.0
      %903 = vmatprep.subr.mxu0 0.0
      %904 = vmatpush1.msra.mxu0 0.0
      %905 = vmatprep.subr.mxu0 0.0
      %906 = vmatpush1.msra.mxu0 0.0
      %907 = vmatprep.subr.mxu0 0.0
      %908 = vmatpush1.msra.mxu0 0.0
      %909 = vmatprep.subr.mxu0 0.0
      %v910 = vand.u32 %v349, 4294901760
      %v911 = vsub.f32 %v349, %v910
      %v912 = vand.u32 %v911, 4294901760
      %v913 = vsub.f32 %v911, %v912
      %v914 = vand.u32 %v913, 4294901760
      %915 = vmatpush1.msra.mxu0 %v914
      %916 = vmatprep.subr.mxu0 0.0
      %v917 = vand.u32 %v348, 4294901760
      %v918 = vsub.f32 %v348, %v917
      %v919 = vand.u32 %v918, 4294901760
      %v920 = vsub.f32 %v918, %v919
      %v921 = vand.u32 %v920, 4294901760
      %922 = vmatpush1.msra.mxu0 %v921
      %923 = vmatprep.subr.mxu0 0.0
      %v924 = vand.u32 %v347, 4294901760
      %v925 = vsub.f32 %v347, %v924
      %v926 = vand.u32 %v925, 4294901760
      %v927 = vsub.f32 %v925, %v926
      %v928 = vand.u32 %v927, 4294901760
      %929 = vmatpush1.msra.mxu0 %v928
      %930 = vmatprep.subr.mxu0 0.0
      %931 = vmatpush2.msra.mxu0 0.0
      %932 = vmatprep.subr.mxu0 0.0
      %933 = vmatpush2.msra.mxu0 0.0
      %934 = vmatprep.subr.mxu0 0.0
      %935 = vmatpush2.msra.mxu0 0.0
      %936 = vmatprep.subr.mxu0 0.0
      %937 = vmatpush2.msra.mxu0 0.0
      %938 = vmatprep.subr.mxu0 0.0
      %939 = vmatpush2.msra.mxu0 0.0
      %940 = vmatprep.subr.mxu0 0.0
      %941 = vmatpush2.msra.mxu0 0.0
      %942 = vmatprep.subr.mxu0 0.0
      %943 = vmatpush2.msra.mxu0 0.0
      %944 = vmatprep.subr.mxu0 0.0
      %945 = vmatpush2.msra.mxu0 0.0
      %946 = vmatprep.subr.mxu0 0.0
      %947 = vmatpush2.msra.mxu0 0.0
      %948 = vmatprep.subr.mxu0 0.0
      %949 = vmatpush2.msra.mxu0 0.0
      %950 = vmatprep.subr.mxu0 0.0
      %951 = vmatpush2.msra.mxu0 0.0
      %952 = vmatprep.subr.mxu0 0.0
      %953 = vmatpush2.msra.mxu0 0.0
      %954 = vmatprep.subr.mxu0 0.0
      %955 = vmatpush2.msra.mxu0 0.0
      %956 = vmatprep.subr.mxu0 0.0
      %957 = vmatpush2.msra.mxu0 0.0
      %958 = vmatprep.subr.mxu0 0.0
      %959 = vmatpush2.msra.mxu0 0.0
      %960 = vmatprep.subr.mxu0 0.0
      %961 = vmatpush2.msra.mxu0 0.0
      %962 = vmatprep.mubr.f32.mxu0 0.0
      %v963 = vand.u32 %v803, 4294901760
      %964 = vmatmul.mubr.f32.gmra.mxu0 %v963
      %v965 = vpop.f32.mrf.mxu0
      %v966 = vadd.f32 %v880, %v965
      %v967 = vpop.f32.mrf.mxu0
      %968 = vdwg.mxu0
      %969 = vmatprep.subr.mxu0 0.0
      %970 = vmatpush1.msra.mxu0 0.0
      %971 = vmatprep.subr.mxu0 0.0
      %972 = vmatpush1.msra.mxu0 0.0
      %973 = vmatprep.subr.mxu0 0.0
      %974 = vmatpush1.msra.mxu0 0.0
      %975 = vmatprep.subr.mxu0 0.0
      %976 = vmatpush1.msra.mxu0 0.0
      %977 = vmatprep.subr.mxu0 0.0
      %978 = vmatpush1.msra.mxu0 0.0
      %979 = vmatprep.subr.mxu0 0.0
      %980 = vmatpush1.msra.mxu0 0.0
      %981 = vmatprep.subr.mxu0 0.0
      %982 = vmatpush1.msra.mxu0 0.0
      %983 = vmatprep.subr.mxu0 0.0
      %984 = vmatpush1.msra.mxu0 0.0
      %985 = vmatprep.subr.mxu0 0.0
      %986 = vmatpush1.msra.mxu0 0.0
      %987 = vmatprep.subr.mxu0 0.0
      %988 = vmatpush1.msra.mxu0 0.0
      %989 = vmatprep.subr.mxu0 0.0
      %990 = vmatpush1.msra.mxu0 0.0
      %991 = vmatprep.subr.mxu0 0.0
      %992 = vmatpush1.msra.mxu0 0.0
      %993 = vmatprep.subr.mxu0 0.0
      %994 = vmatpush1.msra.mxu0 0.0
      %995 = vmatprep.subr.mxu0 0.0
      %v996 = vand.u32 %v349, 4294901760
      %v997 = vsub.f32 %v349, %v996
      %998 = vmatpush1.msra.mxu0 %v997
      %999 = vmatprep.subr.mxu0 0.0
      %v1000 = vand.u32 %v348, 4294901760
      %v1001 = vsub.f32 %v348, %v1000
      %1002 = vmatpush1.msra.mxu0 %v1001
      %1003 = vmatprep.subr.mxu0 0.0
      %v1004 = vand.u32 %v347, 4294901760
      %v1005 = vsub.f32 %v347, %v1004
      %1006 = vmatpush1.msra.mxu0 %v1005
      %1007 = vmatprep.subr.mxu0 0.0
      %1008 = vmatpush2.msra.mxu0 0.0
      %1009 = vmatprep.subr.mxu0 0.0
      %1010 = vmatpush2.msra.mxu0 0.0
      %1011 = vmatprep.subr.mxu0 0.0
      %1012 = vmatpush2.msra.mxu0 0.0
      %1013 = vmatprep.subr.mxu0 0.0
      %1014 = vmatpush2.msra.mxu0 0.0
      %1015 = vmatprep.subr.mxu0 0.0
      %1016 = vmatpush2.msra.mxu0 0.0
      %1017 = vmatprep.subr.mxu0 0.0
      %1018 = vmatpush2.msra.mxu0 0.0
      %1019 = vmatprep.subr.mxu0 0.0
      %1020 = vmatpush2.msra.mxu0 0.0
      %1021 = vmatprep.subr.mxu0 0.0
      %1022 = vmatpush2.msra.mxu0 0.0
      %1023 = vmatprep.subr.mxu0 0.0
      %1024 = vmatpush2.msra.mxu0 0.0
      %1025 = vmatprep.subr.mxu0 0.0
      %1026 = vmatpush2.msra.mxu0 0.0
      %1027 = vmatprep.subr.mxu0 0.0
      %1028 = vmatpush2.msra.mxu0 0.0
      %1029 = vmatprep.subr.mxu0 0.0
      %1030 = vmatpush2.msra.mxu0 0.0
      %1031 = vmatprep.subr.mxu0 0.0
      %1032 = vmatpush2.msra.mxu0 0.0
      %1033 = vmatprep.subr.mxu0 0.0
      %1034 = vmatpush2.msra.mxu0 0.0
      %1035 = vmatprep.subr.mxu0 0.0
      %1036 = vmatpush2.msra.mxu0 0.0
      %1037 = vmatprep.subr.mxu0 0.0
      %1038 = vmatpush2.msra.mxu0 0.0
      %1039 = vmatprep.mubr.f32.mxu0 0.0
      %v1040 = vand.u32 %v803, 4294901760
      %v1041 = vsub.f32 %v803, %v1040
      %1042 = vmatmul.mubr.f32.gmra.mxu0 %v1041
      %v1043 = vpop.f32.mrf.mxu0
      %v1044 = vadd.f32 %v966, %v1043
      %v1045 = vpop.f32.mrf.mxu0
      %1046 = vdwg.mxu0
      %1047 = vmatprep.subr.mxu0 0.0
      %1048 = vmatpush1.msra.mxu0 0.0
      %1049 = vmatprep.subr.mxu0 0.0
      %1050 = vmatpush1.msra.mxu0 0.0
      %1051 = vmatprep.subr.mxu0 0.0
      %1052 = vmatpush1.msra.mxu0 0.0
      %1053 = vmatprep.subr.mxu0 0.0
      %1054 = vmatpush1.msra.mxu0 0.0
      %1055 = vmatprep.subr.mxu0 0.0
      %1056 = vmatpush1.msra.mxu0 0.0
      %1057 = vmatprep.subr.mxu0 0.0
      %1058 = vmatpush1.msra.mxu0 0.0
      %1059 = vmatprep.subr.mxu0 0.0
      %1060 = vmatpush1.msra.mxu0 0.0
      %1061 = vmatprep.subr.mxu0 0.0
      %1062 = vmatpush1.msra.mxu0 0.0
      %1063 = vmatprep.subr.mxu0 0.0
      %1064 = vmatpush1.msra.mxu0 0.0
      %1065 = vmatprep.subr.mxu0 0.0
      %1066 = vmatpush1.msra.mxu0 0.0
      %1067 = vmatprep.subr.mxu0 0.0
      %1068 = vmatpush1.msra.mxu0 0.0
      %1069 = vmatprep.subr.mxu0 0.0
      %1070 = vmatpush1.msra.mxu0 0.0
      %1071 = vmatprep.subr.mxu0 0.0
      %1072 = vmatpush1.msra.mxu0 0.0
      %1073 = vmatprep.subr.mxu0 0.0
      %v1074 = vand.u32 %v349, 4294901760
      %1075 = vmatpush1.msra.mxu0 %v1074
      %1076 = vmatprep.subr.mxu0 0.0
      %v1077 = vand.u32 %v348, 4294901760
      %1078 = vmatpush1.msra.mxu0 %v1077
      %1079 = vmatprep.subr.mxu0 0.0
      %v1080 = vand.u32 %v347, 4294901760
      %1081 = vmatpush1.msra.mxu0 %v1080
      %1082 = vmatprep.subr.mxu0 0.0
      %1083 = vmatpush2.msra.mxu0 0.0
      %1084 = vmatprep.subr.mxu0 0.0
      %1085 = vmatpush2.msra.mxu0 0.0
      %1086 = vmatprep.subr.mxu0 0.0
      %1087 = vmatpush2.msra.mxu0 0.0
      %1088 = vmatprep.subr.mxu0 0.0
      %1089 = vmatpush2.msra.mxu0 0.0
      %1090 = vmatprep.subr.mxu0 0.0
      %1091 = vmatpush2.msra.mxu0 0.0
      %1092 = vmatprep.subr.mxu0 0.0
      %1093 = vmatpush2.msra.mxu0 0.0
      %1094 = vmatprep.subr.mxu0 0.0
      %1095 = vmatpush2.msra.mxu0 0.0
      %1096 = vmatprep.subr.mxu0 0.0
      %1097 = vmatpush2.msra.mxu0 0.0
      %1098 = vmatprep.subr.mxu0 0.0
      %1099 = vmatpush2.msra.mxu0 0.0
      %1100 = vmatprep.subr.mxu0 0.0
      %1101 = vmatpush2.msra.mxu0 0.0
      %1102 = vmatprep.subr.mxu0 0.0
      %1103 = vmatpush2.msra.mxu0 0.0
      %1104 = vmatprep.subr.mxu0 0.0
      %1105 = vmatpush2.msra.mxu0 0.0
      %1106 = vmatprep.subr.mxu0 0.0
      %1107 = vmatpush2.msra.mxu0 0.0
      %1108 = vmatprep.subr.mxu0 0.0
      %1109 = vmatpush2.msra.mxu0 0.0
      %1110 = vmatprep.subr.mxu0 0.0
      %1111 = vmatpush2.msra.mxu0 0.0
      %1112 = vmatprep.subr.mxu0 0.0
      %1113 = vmatpush2.msra.mxu0 0.0
      %1114 = vmatprep.mubr.f32.mxu0 0.0
      %v1115 = vand.u32 %v803, 4294901760
      %v1116 = vsub.f32 %v803, %v1115
      %v1117 = vand.u32 %v1116, 4294901760
      %1118 = vmatmul.mubr.f32.gmra.mxu0 %v1117
      %v1119 = vpop.f32.mrf.mxu0
      %v1120 = vadd.f32 %v1044, %v1119
      %v1121 = vpop.f32.mrf.mxu0
      %1122 = vdwg.mxu0
      %1123 = vmatprep.subr.mxu0 0.0
      %1124 = vmatpush1.msra.mxu0 0.0
      %1125 = vmatprep.subr.mxu0 0.0
      %1126 = vmatpush1.msra.mxu0 0.0
      %1127 = vmatprep.subr.mxu0 0.0
      %1128 = vmatpush1.msra.mxu0 0.0
      %1129 = vmatprep.subr.mxu0 0.0
      %1130 = vmatpush1.msra.mxu0 0.0
      %1131 = vmatprep.subr.mxu0 0.0
      %1132 = vmatpush1.msra.mxu0 0.0
      %1133 = vmatprep.subr.mxu0 0.0
      %1134 = vmatpush1.msra.mxu0 0.0
      %1135 = vmatprep.subr.mxu0 0.0
      %1136 = vmatpush1.msra.mxu0 0.0
      %1137 = vmatprep.subr.mxu0 0.0
      %1138 = vmatpush1.msra.mxu0 0.0
      %1139 = vmatprep.subr.mxu0 0.0
      %1140 = vmatpush1.msra.mxu0 0.0
      %1141 = vmatprep.subr.mxu0 0.0
      %1142 = vmatpush1.msra.mxu0 0.0
      %1143 = vmatprep.subr.mxu0 0.0
      %1144 = vmatpush1.msra.mxu0 0.0
      %1145 = vmatprep.subr.mxu0 0.0
      %1146 = vmatpush1.msra.mxu0 0.0
      %1147 = vmatprep.subr.mxu0 0.0
      %1148 = vmatpush1.msra.mxu0 0.0
      %1149 = vmatprep.subr.mxu0 0.0
      %v1150 = vand.u32 %v349, 4294901760
      %v1151 = vsub.f32 %v349, %v1150
      %v1152 = vand.u32 %v1151, 4294901760
      %1153 = vmatpush1.msra.mxu0 %v1152
      %1154 = vmatprep.subr.mxu0 0.0
      %v1155 = vand.u32 %v348, 4294901760
      %v1156 = vsub.f32 %v348, %v1155
      %v1157 = vand.u32 %v1156, 4294901760
      %1158 = vmatpush1.msra.mxu0 %v1157
      %1159 = vmatprep.subr.mxu0 0.0
      %v1160 = vand.u32 %v347, 4294901760
      %v1161 = vsub.f32 %v347, %v1160
      %v1162 = vand.u32 %v1161, 4294901760
      %1163 = vmatpush1.msra.mxu0 %v1162
      %1164 = vmatprep.subr.mxu0 0.0
      %1165 = vmatpush2.msra.mxu0 0.0
      %1166 = vmatprep.subr.mxu0 0.0
      %1167 = vmatpush2.msra.mxu0 0.0
      %1168 = vmatprep.subr.mxu0 0.0
      %1169 = vmatpush2.msra.mxu0 0.0
      %1170 = vmatprep.subr.mxu0 0.0
      %1171 = vmatpush2.msra.mxu0 0.0
      %1172 = vmatprep.subr.mxu0 0.0
      %1173 = vmatpush2.msra.mxu0 0.0
      %1174 = vmatprep.subr.mxu0 0.0
      %1175 = vmatpush2.msra.mxu0 0.0
      %1176 = vmatprep.subr.mxu0 0.0
      %1177 = vmatpush2.msra.mxu0 0.0
      %1178 = vmatprep.subr.mxu0 0.0
      %1179 = vmatpush2.msra.mxu0 0.0
      %1180 = vmatprep.subr.mxu0 0.0
      %1181 = vmatpush2.msra.mxu0 0.0
      %1182 = vmatprep.subr.mxu0 0.0
      %1183 = vmatpush2.msra.mxu0 0.0
      %1184 = vmatprep.subr.mxu0 0.0
      %1185 = vmatpush2.msra.mxu0 0.0
      %1186 = vmatprep.subr.mxu0 0.0
      %1187 = vmatpush2.msra.mxu0 0.0
      %1188 = vmatprep.subr.mxu0 0.0
      %1189 = vmatpush2.msra.mxu0 0.0
      %1190 = vmatprep.subr.mxu0 0.0
      %1191 = vmatpush2.msra.mxu0 0.0
      %1192 = vmatprep.subr.mxu0 0.0
      %1193 = vmatpush2.msra.mxu0 0.0
      %1194 = vmatprep.subr.mxu0 0.0
      %1195 = vmatpush2.msra.mxu0 0.0
      %1196 = vmatprep.mubr.f32.mxu0 0.0
      %v1197 = vand.u32 %v803, 4294901760
      %1198 = vmatmul.mubr.f32.gmra.mxu0 %v1197
      %v1199 = vpop.f32.mrf.mxu0
      %v1200 = vadd.f32 %v1120, %v1199
      %v1201 = vpop.f32.mrf.mxu0
      %1202 = vdwg.mxu0
      %1203 = vmatprep.subr.mxu0 0.0
      %1204 = vmatpush1.msra.mxu0 0.0
      %1205 = vmatprep.subr.mxu0 0.0
      %1206 = vmatpush1.msra.mxu0 0.0
      %1207 = vmatprep.subr.mxu0 0.0
      %1208 = vmatpush1.msra.mxu0 0.0
      %1209 = vmatprep.subr.mxu0 0.0
      %1210 = vmatpush1.msra.mxu0 0.0
      %1211 = vmatprep.subr.mxu0 0.0
      %1212 = vmatpush1.msra.mxu0 0.0
      %1213 = vmatprep.subr.mxu0 0.0
      %1214 = vmatpush1.msra.mxu0 0.0
      %1215 = vmatprep.subr.mxu0 0.0
      %1216 = vmatpush1.msra.mxu0 0.0
      %1217 = vmatprep.subr.mxu0 0.0
      %1218 = vmatpush1.msra.mxu0 0.0
      %1219 = vmatprep.subr.mxu0 0.0
      %1220 = vmatpush1.msra.mxu0 0.0
      %1221 = vmatprep.subr.mxu0 0.0
      %1222 = vmatpush1.msra.mxu0 0.0
      %1223 = vmatprep.subr.mxu0 0.0
      %1224 = vmatpush1.msra.mxu0 0.0
      %1225 = vmatprep.subr.mxu0 0.0
      %1226 = vmatpush1.msra.mxu0 0.0
      %1227 = vmatprep.subr.mxu0 0.0
      %1228 = vmatpush1.msra.mxu0 0.0
      %1229 = vmatprep.subr.mxu0 0.0
      %v1230 = vand.u32 %v349, 4294901760
      %1231 = vmatpush1.msra.mxu0 %v1230
      %1232 = vmatprep.subr.mxu0 0.0
      %v1233 = vand.u32 %v348, 4294901760
      %1234 = vmatpush1.msra.mxu0 %v1233
      %1235 = vmatprep.subr.mxu0 0.0
      %v1236 = vand.u32 %v347, 4294901760
      %1237 = vmatpush1.msra.mxu0 %v1236
      %1238 = vmatprep.subr.mxu0 0.0
      %1239 = vmatpush2.msra.mxu0 0.0
      %1240 = vmatprep.subr.mxu0 0.0
      %1241 = vmatpush2.msra.mxu0 0.0
      %1242 = vmatprep.subr.mxu0 0.0
      %1243 = vmatpush2.msra.mxu0 0.0
      %1244 = vmatprep.subr.mxu0 0.0
      %1245 = vmatpush2.msra.mxu0 0.0
      %1246 = vmatprep.subr.mxu0 0.0
      %1247 = vmatpush2.msra.mxu0 0.0
      %1248 = vmatprep.subr.mxu0 0.0
      %1249 = vmatpush2.msra.mxu0 0.0
      %1250 = vmatprep.subr.mxu0 0.0
      %1251 = vmatpush2.msra.mxu0 0.0
      %1252 = vmatprep.subr.mxu0 0.0
      %1253 = vmatpush2.msra.mxu0 0.0
      %1254 = vmatprep.subr.mxu0 0.0
      %1255 = vmatpush2.msra.mxu0 0.0
      %1256 = vmatprep.subr.mxu0 0.0
      %1257 = vmatpush2.msra.mxu0 0.0
      %1258 = vmatprep.subr.mxu0 0.0
      %1259 = vmatpush2.msra.mxu0 0.0
      %1260 = vmatprep.subr.mxu0 0.0
      %1261 = vmatpush2.msra.mxu0 0.0
      %1262 = vmatprep.subr.mxu0 0.0
      %1263 = vmatpush2.msra.mxu0 0.0
      %1264 = vmatprep.subr.mxu0 0.0
      %1265 = vmatpush2.msra.mxu0 0.0
      %1266 = vmatprep.subr.mxu0 0.0
      %1267 = vmatpush2.msra.mxu0 0.0
      %1268 = vmatprep.subr.mxu0 0.0
      %1269 = vmatpush2.msra.mxu0 0.0
      %1270 = vmatprep.mubr.f32.mxu0 0.0
      %v1271 = vand.u32 %v803, 4294901760
      %1272 = vmatmul.mubr.f32.gmra.mxu0 %v1271
      %v1273 = vpop.f32.mrf.mxu0
      %v1274 = vadd.f32 %v1200, %v1273
      %v1275 = vpop.f32.mrf.mxu0
      %1276 = vdwg.mxu0
      %v1277 = vld [vmem:[%s4] sm:$0x1]
      %v1279 = vlaneseq
      %v1280 = vshrl.u32 %v1279, 7
      %v1281 = vsub.s32 0, %v1280
      %v1282 = vrot.slane %v1277, %v1281
      %v1284 = vadd.f32 %v1274, %v1282
      %vm1285 = vcmp.ge.f32.partialorder %v1284, 0.0
      %v1286 = vmul.f32 %v1284, 0.2
      %v1287 = vsel %vm1285, %v1284, %v1286
      %v1288 = vld [vmem:[%s5] sm:$0xff]
      %v1289 = vld [vmem:[%s5 + $0x8] sm:$0xff]
      %v1290 = vld [vmem:[%s5 + $0x10] sm:$0xff]
      %v1291 = vld [vmem:[%s5 + $0x18] sm:$0xff]
      %v1292 = vld [vmem:[%s5 + $0x20] sm:$0xff]
      %v1293 = vld [vmem:[%s5 + $0x28] sm:$0xff]
      %v1294 = vld [vmem:[%s5 + $0x30] sm:$0xff]
      %v1295 = vld [vmem:[%s5 + $0x38] sm:$0xff]
      %v1296 = vld [vmem:[%s6] sm:$0x1]
      %v1298 = vlaneseq
      %v1299 = vshrl.u32 %v1298, 7
      %v1300 = vsub.s32 0, %v1299
      %v1301 = vrot.slane %v1296, %v1300
      %vm1303 = vcmask 523264
      %v1305 = vsel %vm1303, %v1287, 0
      %1307 = vmatprep.subr.mxu0 0.0
      %1308 = vmatpush1.msra.mxu0 0.0
      %1309 = vmatprep.subr.mxu0 0.0
      %1310 = vmatpush1.msra.mxu0 0.0
      %1311 = vmatprep.subr.mxu0 0.0
      %1312 = vmatpush1.msra.mxu0 0.0
      %1313 = vmatprep.subr.mxu0 0.0
      %1314 = vmatpush1.msra.mxu0 0.0
      %1315 = vmatprep.subr.mxu0 0.0
      %1316 = vmatpush1.msra.mxu0 0.0
      %1317 = vmatprep.subr.mxu0 0.0
      %1318 = vmatpush1.msra.mxu0 0.0
      %1319 = vmatprep.subr.mxu0 0.0
      %1320 = vmatpush1.msra.mxu0 0.0
      %1321 = vmatprep.subr.mxu0 0.0
      %1322 = vmatpush1.msra.mxu0 0.0
      %1323 = vmatprep.subr.mxu0 0.0
      %v1324 = vand.u32 %v1295, 4294901760
      %1325 = vmatpush1.msra.mxu0 %v1324
      %1326 = vmatprep.subr.mxu0 0.0
      %v1327 = vand.u32 %v1294, 4294901760
      %1328 = vmatpush1.msra.mxu0 %v1327
      %1329 = vmatprep.subr.mxu0 0.0
      %v1330 = vand.u32 %v1293, 4294901760
      %1331 = vmatpush1.msra.mxu0 %v1330
      %1332 = vmatprep.subr.mxu0 0.0
      %v1333 = vand.u32 %v1292, 4294901760
      %1334 = vmatpush1.msra.mxu0 %v1333
      %1335 = vmatprep.subr.mxu0 0.0
      %v1336 = vand.u32 %v1291, 4294901760
      %1337 = vmatpush1.msra.mxu0 %v1336
      %1338 = vmatprep.subr.mxu0 0.0
      %v1339 = vand.u32 %v1290, 4294901760
      %1340 = vmatpush1.msra.mxu0 %v1339
      %1341 = vmatprep.subr.mxu0 0.0
      %v1342 = vand.u32 %v1289, 4294901760
      %1343 = vmatpush1.msra.mxu0 %v1342
      %1344 = vmatprep.subr.mxu0 0.0
      %v1345 = vand.u32 %v1288, 4294901760
      %1346 = vmatpush1.msra.mxu0 %v1345
      %1347 = vmatprep.subr.mxu0 0.0
      %1348 = vmatpush2.msra.mxu0 0.0
      %1349 = vmatprep.subr.mxu0 0.0
      %1350 = vmatpush2.msra.mxu0 0.0
      %1351 = vmatprep.subr.mxu0 0.0
      %1352 = vmatpush2.msra.mxu0 0.0
      %1353 = vmatprep.subr.mxu0 0.0
      %1354 = vmatpush2.msra.mxu0 0.0
      %1355 = vmatprep.subr.mxu0 0.0
      %1356 = vmatpush2.msra.mxu0 0.0
      %1357 = vmatprep.subr.mxu0 0.0
      %1358 = vmatpush2.msra.mxu0 0.0
      %1359 = vmatprep.subr.mxu0 0.0
      %1360 = vmatpush2.msra.mxu0 0.0
      %1361 = vmatprep.subr.mxu0 0.0
      %1362 = vmatpush2.msra.mxu0 0.0
      %1363 = vmatprep.subr.mxu0 0.0
      %1364 = vmatpush2.msra.mxu0 0.0
      %1365 = vmatprep.subr.mxu0 0.0
      %1366 = vmatpush2.msra.mxu0 0.0
      %1367 = vmatprep.subr.mxu0 0.0
      %1368 = vmatpush2.msra.mxu0 0.0
      %1369 = vmatprep.subr.mxu0 0.0
      %1370 = vmatpush2.msra.mxu0 0.0
      %1371 = vmatprep.subr.mxu0 0.0
      %1372 = vmatpush2.msra.mxu0 0.0
      %1373 = vmatprep.subr.mxu0 0.0
      %1374 = vmatpush2.msra.mxu0 0.0
      %1375 = vmatprep.subr.mxu0 0.0
      %1376 = vmatpush2.msra.mxu0 0.0
      %1377 = vmatprep.subr.mxu0 0.0
      %1378 = vmatpush2.msra.mxu0 0.0
      %1379 = vmatprep.mubr.f32.mxu0 0.0
      %v1380 = vand.u32 %v1305, 4294901760
      %v1381 = vsub.f32 %v1305, %v1380
      %v1382 = vand.u32 %v1381, 4294901760
      %v1383 = vsub.f32 %v1381, %v1382
      %v1384 = vand.u32 %v1383, 4294901760
      %1385 = vmatmul.mubr.f32.gmra.mxu0 %v1384
      %v1386 = vpop.f32.mrf.mxu0
      %v1387 = vadd.f32 %v1301, %v1386
      %v1388 = vpop.f32.mrf.mxu0
      %1389 = vdwg.mxu0
      %1390 = vmatprep.subr.mxu0 0.0
      %1391 = vmatpush1.msra.mxu0 0.0
      %1392 = vmatprep.subr.mxu0 0.0
      %1393 = vmatpush1.msra.mxu0 0.0
      %1394 = vmatprep.subr.mxu0 0.0
      %1395 = vmatpush1.msra.mxu0 0.0
      %1396 = vmatprep.subr.mxu0 0.0
      %1397 = vmatpush1.msra.mxu0 0.0
      %1398 = vmatprep.subr.mxu0 0.0
      %1399 = vmatpush1.msra.mxu0 0.0
      %1400 = vmatprep.subr.mxu0 0.0
      %1401 = vmatpush1.msra.mxu0 0.0
      %1402 = vmatprep.subr.mxu0 0.0
      %1403 = vmatpush1.msra.mxu0 0.0
      %1404 = vmatprep.subr.mxu0 0.0
      %1405 = vmatpush1.msra.mxu0 0.0
      %1406 = vmatprep.subr.mxu0 0.0
      %v1407 = vand.u32 %v1295, 4294901760
      %v1408 = vsub.f32 %v1295, %v1407
      %v1409 = vand.u32 %v1408, 4294901760
      %v1410 = vsub.f32 %v1408, %v1409
      %v1411 = vand.u32 %v1410, 4294901760
      %1412 = vmatpush1.msra.mxu0 %v1411
      %1413 = vmatprep.subr.mxu0 0.0
      %v1414 = vand.u32 %v1294, 4294901760
      %v1415 = vsub.f32 %v1294, %v1414
      %v1416 = vand.u32 %v1415, 4294901760
      %v1417 = vsub.f32 %v1415, %v1416
      %v1418 = vand.u32 %v1417, 4294901760
      %1419 = vmatpush1.msra.mxu0 %v1418
      %1420 = vmatprep.subr.mxu0 0.0
      %v1421 = vand.u32 %v1293, 4294901760
      %v1422 = vsub.f32 %v1293, %v1421
      %v1423 = vand.u32 %v1422, 4294901760
      %v1424 = vsub.f32 %v1422, %v1423
      %v1425 = vand.u32 %v1424, 4294901760
      %1426 = vmatpush1.msra.mxu0 %v1425
      %1427 = vmatprep.subr.mxu0 0.0
      %v1428 = vand.u32 %v1292, 4294901760
      %v1429 = vsub.f32 %v1292, %v1428
      %v1430 = vand.u32 %v1429, 4294901760
      %v1431 = vsub.f32 %v1429, %v1430
      %v1432 = vand.u32 %v1431, 4294901760
      %1433 = vmatpush1.msra.mxu0 %v1432
      %1434 = vmatprep.subr.mxu0 0.0
      %v1435 = vand.u32 %v1291, 4294901760
      %v1436 = vsub.f32 %v1291, %v1435
      %v1437 = vand.u32 %v1436, 4294901760
      %v1438 = vsub.f32 %v1436, %v1437
      %v1439 = vand.u32 %v1438, 4294901760
      %1440 = vmatpush1.msra.mxu0 %v1439
      %1441 = vmatprep.subr.mxu0 0.0
      %v1442 = vand.u32 %v1290, 4294901760
      %v1443 = vsub.f32 %v1290, %v1442
      %v1444 = vand.u32 %v1443, 4294901760
      %v1445 = vsub.f32 %v1443, %v1444
      %v1446 = vand.u32 %v1445, 4294901760
      %1447 = vmatpush1.msra.mxu0 %v1446
      %1448 = vmatprep.subr.mxu0 0.0
      %v1449 = vand.u32 %v1289, 4294901760
      %v1450 = vsub.f32 %v1289, %v1449
      %v1451 = vand.u32 %v1450, 4294901760
      %v1452 = vsub.f32 %v1450, %v1451
      %v1453 = vand.u32 %v1452, 4294901760
      %1454 = vmatpush1.msra.mxu0 %v1453
      %1455 = vmatprep.subr.mxu0 0.0
      %v1456 = vand.u32 %v1288, 4294901760
      %v1457 = vsub.f32 %v1288, %v1456
      %v1458 = vand.u32 %v1457, 4294901760
      %v1459 = vsub.f32 %v1457, %v1458
      %v1460 = vand.u32 %v1459, 4294901760
      %1461 = vmatpush1.msra.mxu0 %v1460
      %1462 = vmatprep.subr.mxu0 0.0
      %1463 = vmatpush2.msra.mxu0 0.0
      %1464 = vmatprep.subr.mxu0 0.0
      %1465 = vmatpush2.msra.mxu0 0.0
      %1466 = vmatprep.subr.mxu0 0.0
      %1467 = vmatpush2.msra.mxu0 0.0
      %1468 = vmatprep.subr.mxu0 0.0
      %1469 = vmatpush2.msra.mxu0 0.0
      %1470 = vmatprep.subr.mxu0 0.0
      %1471 = vmatpush2.msra.mxu0 0.0
      %1472 = vmatprep.subr.mxu0 0.0
      %1473 = vmatpush2.msra.mxu0 0.0
      %1474 = vmatprep.subr.mxu0 0.0
      %1475 = vmatpush2.msra.mxu0 0.0
      %1476 = vmatprep.subr.mxu0 0.0
      %1477 = vmatpush2.msra.mxu0 0.0
      %1478 = vmatprep.subr.mxu0 0.0
      %1479 = vmatpush2.msra.mxu0 0.0
      %1480 = vmatprep.subr.mxu0 0.0
      %1481 = vmatpush2.msra.mxu0 0.0
      %1482 = vmatprep.subr.mxu0 0.0
      %1483 = vmatpush2.msra.mxu0 0.0
      %1484 = vmatprep.subr.mxu0 0.0
      %1485 = vmatpush2.msra.mxu0 0.0
      %1486 = vmatprep.subr.mxu0 0.0
      %1487 = vmatpush2.msra.mxu0 0.0
      %1488 = vmatprep.subr.mxu0 0.0
      %1489 = vmatpush2.msra.mxu0 0.0
      %1490 = vmatprep.subr.mxu0 0.0
      %1491 = vmatpush2.msra.mxu0 0.0
      %1492 = vmatprep.subr.mxu0 0.0
      %1493 = vmatpush2.msra.mxu0 0.0
      %1494 = vmatprep.mubr.f32.mxu0 0.0
      %v1495 = vand.u32 %v1305, 4294901760
      %1496 = vmatmul.mubr.f32.gmra.mxu0 %v1495
      %v1497 = vpop.f32.mrf.mxu0
      %v1498 = vadd.f32 %v1387, %v1497
      %v1499 = vpop.f32.mrf.mxu0
      %1500 = vdwg.mxu0
      %1501 = vmatprep.subr.mxu0 0.0
      %1502 = vmatpush1.msra.mxu0 0.0
      %1503 = vmatprep.subr.mxu0 0.0
      %1504 = vmatpush1.msra.mxu0 0.0
      %1505 = vmatprep.subr.mxu0 0.0
      %1506 = vmatpush1.msra.mxu0 0.0
      %1507 = vmatprep.subr.mxu0 0.0
      %1508 = vmatpush1.msra.mxu0 0.0
      %1509 = vmatprep.subr.mxu0 0.0
      %1510 = vmatpush1.msra.mxu0 0.0
      %1511 = vmatprep.subr.mxu0 0.0
      %1512 = vmatpush1.msra.mxu0 0.0
      %1513 = vmatprep.subr.mxu0 0.0
      %1514 = vmatpush1.msra.mxu0 0.0
      %1515 = vmatprep.subr.mxu0 0.0
      %1516 = vmatpush1.msra.mxu0 0.0
      %1517 = vmatprep.subr.mxu0 0.0
      %v1518 = vand.u32 %v1295, 4294901760
      %v1519 = vsub.f32 %v1295, %v1518
      %1520 = vmatpush1.msra.mxu0 %v1519
      %1521 = vmatprep.subr.mxu0 0.0
      %v1522 = vand.u32 %v1294, 4294901760
      %v1523 = vsub.f32 %v1294, %v1522
      %1524 = vmatpush1.msra.mxu0 %v1523
      %1525 = vmatprep.subr.mxu0 0.0
      %v1526 = vand.u32 %v1293, 4294901760
      %v1527 = vsub.f32 %v1293, %v1526
      %1528 = vmatpush1.msra.mxu0 %v1527
      %1529 = vmatprep.subr.mxu0 0.0
      %v1530 = vand.u32 %v1292, 4294901760
      %v1531 = vsub.f32 %v1292, %v1530
      %1532 = vmatpush1.msra.mxu0 %v1531
      %1533 = vmatprep.subr.mxu0 0.0
      %v1534 = vand.u32 %v1291, 4294901760
      %v1535 = vsub.f32 %v1291, %v1534
      %1536 = vmatpush1.msra.mxu0 %v1535
      %1537 = vmatprep.subr.mxu0 0.0
      %v1538 = vand.u32 %v1290, 4294901760
      %v1539 = vsub.f32 %v1290, %v1538
      %1540 = vmatpush1.msra.mxu0 %v1539
      %1541 = vmatprep.subr.mxu0 0.0
      %v1542 = vand.u32 %v1289, 4294901760
      %v1543 = vsub.f32 %v1289, %v1542
      %1544 = vmatpush1.msra.mxu0 %v1543
      %1545 = vmatprep.subr.mxu0 0.0
      %v1546 = vand.u32 %v1288, 4294901760
      %v1547 = vsub.f32 %v1288, %v1546
      %1548 = vmatpush1.msra.mxu0 %v1547
      %1549 = vmatprep.subr.mxu0 0.0
      %1550 = vmatpush2.msra.mxu0 0.0
      %1551 = vmatprep.subr.mxu0 0.0
      %1552 = vmatpush2.msra.mxu0 0.0
      %1553 = vmatprep.subr.mxu0 0.0
      %1554 = vmatpush2.msra.mxu0 0.0
      %1555 = vmatprep.subr.mxu0 0.0
      %1556 = vmatpush2.msra.mxu0 0.0
      %1557 = vmatprep.subr.mxu0 0.0
      %1558 = vmatpush2.msra.mxu0 0.0
      %1559 = vmatprep.subr.mxu0 0.0
      %1560 = vmatpush2.msra.mxu0 0.0
      %1561 = vmatprep.subr.mxu0 0.0
      %1562 = vmatpush2.msra.mxu0 0.0
      %1563 = vmatprep.subr.mxu0 0.0
      %1564 = vmatpush2.msra.mxu0 0.0
      %1565 = vmatprep.subr.mxu0 0.0
      %1566 = vmatpush2.msra.mxu0 0.0
      %1567 = vmatprep.subr.mxu0 0.0
      %1568 = vmatpush2.msra.mxu0 0.0
      %1569 = vmatprep.subr.mxu0 0.0
      %1570 = vmatpush2.msra.mxu0 0.0
      %1571 = vmatprep.subr.mxu0 0.0
      %1572 = vmatpush2.msra.mxu0 0.0
      %1573 = vmatprep.subr.mxu0 0.0
      %1574 = vmatpush2.msra.mxu0 0.0
      %1575 = vmatprep.subr.mxu0 0.0
      %1576 = vmatpush2.msra.mxu0 0.0
      %1577 = vmatprep.subr.mxu0 0.0
      %1578 = vmatpush2.msra.mxu0 0.0
      %1579 = vmatprep.subr.mxu0 0.0
      %1580 = vmatpush2.msra.mxu0 0.0
      %1581 = vmatprep.mubr.f32.mxu0 0.0
      %v1582 = vand.u32 %v1305, 4294901760
      %v1583 = vsub.f32 %v1305, %v1582
      %1584 = vmatmul.mubr.f32.gmra.mxu0 %v1583
      %v1585 = vpop.f32.mrf.mxu0
      %v1586 = vadd.f32 %v1498, %v1585
      %v1587 = vpop.f32.mrf.mxu0
      %1588 = vdwg.mxu0
      %1589 = vmatprep.subr.mxu0 0.0
      %1590 = vmatpush1.msra.mxu0 0.0
      %1591 = vmatprep.subr.mxu0 0.0
      %1592 = vmatpush1.msra.mxu0 0.0
      %1593 = vmatprep.subr.mxu0 0.0
      %1594 = vmatpush1.msra.mxu0 0.0
      %1595 = vmatprep.subr.mxu0 0.0
      %1596 = vmatpush1.msra.mxu0 0.0
      %1597 = vmatprep.subr.mxu0 0.0
      %1598 = vmatpush1.msra.mxu0 0.0
      %1599 = vmatprep.subr.mxu0 0.0
      %1600 = vmatpush1.msra.mxu0 0.0
      %1601 = vmatprep.subr.mxu0 0.0
      %1602 = vmatpush1.msra.mxu0 0.0
      %1603 = vmatprep.subr.mxu0 0.0
      %1604 = vmatpush1.msra.mxu0 0.0
      %1605 = vmatprep.subr.mxu0 0.0
      %v1606 = vand.u32 %v1295, 4294901760
      %1607 = vmatpush1.msra.mxu0 %v1606
      %1608 = vmatprep.subr.mxu0 0.0
      %v1609 = vand.u32 %v1294, 4294901760
      %1610 = vmatpush1.msra.mxu0 %v1609
      %1611 = vmatprep.subr.mxu0 0.0
      %v1612 = vand.u32 %v1293, 4294901760
      %1613 = vmatpush1.msra.mxu0 %v1612
      %1614 = vmatprep.subr.mxu0 0.0
      %v1615 = vand.u32 %v1292, 4294901760
      %1616 = vmatpush1.msra.mxu0 %v1615
      %1617 = vmatprep.subr.mxu0 0.0
      %v1618 = vand.u32 %v1291, 4294901760
      %1619 = vmatpush1.msra.mxu0 %v1618
      %1620 = vmatprep.subr.mxu0 0.0
      %v1621 = vand.u32 %v1290, 4294901760
      %1622 = vmatpush1.msra.mxu0 %v1621
      %1623 = vmatprep.subr.mxu0 0.0
      %v1624 = vand.u32 %v1289, 4294901760
      %1625 = vmatpush1.msra.mxu0 %v1624
      %1626 = vmatprep.subr.mxu0 0.0
      %v1627 = vand.u32 %v1288, 4294901760
      %1628 = vmatpush1.msra.mxu0 %v1627
      %1629 = vmatprep.subr.mxu0 0.0
      %1630 = vmatpush2.msra.mxu0 0.0
      %1631 = vmatprep.subr.mxu0 0.0
      %1632 = vmatpush2.msra.mxu0 0.0
      %1633 = vmatprep.subr.mxu0 0.0
      %1634 = vmatpush2.msra.mxu0 0.0
      %1635 = vmatprep.subr.mxu0 0.0
      %1636 = vmatpush2.msra.mxu0 0.0
      %1637 = vmatprep.subr.mxu0 0.0
      %1638 = vmatpush2.msra.mxu0 0.0
      %1639 = vmatprep.subr.mxu0 0.0
      %1640 = vmatpush2.msra.mxu0 0.0
      %1641 = vmatprep.subr.mxu0 0.0
      %1642 = vmatpush2.msra.mxu0 0.0
      %1643 = vmatprep.subr.mxu0 0.0
      %1644 = vmatpush2.msra.mxu0 0.0
      %1645 = vmatprep.subr.mxu0 0.0
      %1646 = vmatpush2.msra.mxu0 0.0
      %1647 = vmatprep.subr.mxu0 0.0
      %1648 = vmatpush2.msra.mxu0 0.0
      %1649 = vmatprep.subr.mxu0 0.0
      %1650 = vmatpush2.msra.mxu0 0.0
      %1651 = vmatprep.subr.mxu0 0.0
      %1652 = vmatpush2.msra.mxu0 0.0
      %1653 = vmatprep.subr.mxu0 0.0
      %1654 = vmatpush2.msra.mxu0 0.0
      %1655 = vmatprep.subr.mxu0 0.0
      %1656 = vmatpush2.msra.mxu0 0.0
      %1657 = vmatprep.subr.mxu0 0.0
      %1658 = vmatpush2.msra.mxu0 0.0
      %1659 = vmatprep.subr.mxu0 0.0
      %1660 = vmatpush2.msra.mxu0 0.0
      %1661 = vmatprep.mubr.f32.mxu0 0.0
      %v1662 = vand.u32 %v1305, 4294901760
      %v1663 = vsub.f32 %v1305, %v1662
      %v1664 = vand.u32 %v1663, 4294901760
      %1665 = vmatmul.mubr.f32.gmra.mxu0 %v1664
      %v1666 = vpop.f32.mrf.mxu0
      %v1667 = vadd.f32 %v1586, %v1666
      %v1668 = vpop.f32.mrf.mxu0
      %1669 = vdwg.mxu0
      %1670 = vmatprep.subr.mxu0 0.0
      %1671 = vmatpush1.msra.mxu0 0.0
      %1672 = vmatprep.subr.mxu0 0.0
      %1673 = vmatpush1.msra.mxu0 0.0
      %1674 = vmatprep.subr.mxu0 0.0
      %1675 = vmatpush1.msra.mxu0 0.0
      %1676 = vmatprep.subr.mxu0 0.0
      %1677 = vmatpush1.msra.mxu0 0.0
      %1678 = vmatprep.subr.mxu0 0.0
      %1679 = vmatpush1.msra.mxu0 0.0
      %1680 = vmatprep.subr.mxu0 0.0
      %1681 = vmatpush1.msra.mxu0 0.0
      %1682 = vmatprep.subr.mxu0 0.0
      %1683 = vmatpush1.msra.mxu0 0.0
      %1684 = vmatprep.subr.mxu0 0.0
      %1685 = vmatpush1.msra.mxu0 0.0
      %1686 = vmatprep.subr.mxu0 0.0
      %v1687 = vand.u32 %v1295, 4294901760
      %v1688 = vsub.f32 %v1295, %v1687
      %v1689 = vand.u32 %v1688, 4294901760
      %1690 = vmatpush1.msra.mxu0 %v1689
      %1691 = vmatprep.subr.mxu0 0.0
      %v1692 = vand.u32 %v1294, 4294901760
      %v1693 = vsub.f32 %v1294, %v1692
      %v1694 = vand.u32 %v1693, 4294901760
      %1695 = vmatpush1.msra.mxu0 %v1694
      %1696 = vmatprep.subr.mxu0 0.0
      %v1697 = vand.u32 %v1293, 4294901760
      %v1698 = vsub.f32 %v1293, %v1697
      %v1699 = vand.u32 %v1698, 4294901760
      %1700 = vmatpush1.msra.mxu0 %v1699
      %1701 = vmatprep.subr.mxu0 0.0
      %v1702 = vand.u32 %v1292, 4294901760
      %v1703 = vsub.f32 %v1292, %v1702
      %v1704 = vand.u32 %v1703, 4294901760
      %1705 = vmatpush1.msra.mxu0 %v1704
      %1706 = vmatprep.subr.mxu0 0.0
      %v1707 = vand.u32 %v1291, 4294901760
      %v1708 = vsub.f32 %v1291, %v1707
      %v1709 = vand.u32 %v1708, 4294901760
      %1710 = vmatpush1.msra.mxu0 %v1709
      %1711 = vmatprep.subr.mxu0 0.0
      %v1712 = vand.u32 %v1290, 4294901760
      %v1713 = vsub.f32 %v1290, %v1712
      %v1714 = vand.u32 %v1713, 4294901760
      %1715 = vmatpush1.msra.mxu0 %v1714
      %1716 = vmatprep.subr.mxu0 0.0
      %v1717 = vand.u32 %v1289, 4294901760
      %v1718 = vsub.f32 %v1289, %v1717
      %v1719 = vand.u32 %v1718, 4294901760
      %1720 = vmatpush1.msra.mxu0 %v1719
      %1721 = vmatprep.subr.mxu0 0.0
      %v1722 = vand.u32 %v1288, 4294901760
      %v1723 = vsub.f32 %v1288, %v1722
      %v1724 = vand.u32 %v1723, 4294901760
      %1725 = vmatpush1.msra.mxu0 %v1724
      %1726 = vmatprep.subr.mxu0 0.0
      %1727 = vmatpush2.msra.mxu0 0.0
      %1728 = vmatprep.subr.mxu0 0.0
      %1729 = vmatpush2.msra.mxu0 0.0
      %1730 = vmatprep.subr.mxu0 0.0
      %1731 = vmatpush2.msra.mxu0 0.0
      %1732 = vmatprep.subr.mxu0 0.0
      %1733 = vmatpush2.msra.mxu0 0.0
      %1734 = vmatprep.subr.mxu0 0.0
      %1735 = vmatpush2.msra.mxu0 0.0
      %1736 = vmatprep.subr.mxu0 0.0
      %1737 = vmatpush2.msra.mxu0 0.0
      %1738 = vmatprep.subr.mxu0 0.0
      %1739 = vmatpush2.msra.mxu0 0.0
      %1740 = vmatprep.subr.mxu0 0.0
      %1741 = vmatpush2.msra.mxu0 0.0
      %1742 = vmatprep.subr.mxu0 0.0
      %1743 = vmatpush2.msra.mxu0 0.0
      %1744 = vmatprep.subr.mxu0 0.0
      %1745 = vmatpush2.msra.mxu0 0.0
      %1746 = vmatprep.subr.mxu0 0.0
      %1747 = vmatpush2.msra.mxu0 0.0
      %1748 = vmatprep.subr.mxu0 0.0
      %1749 = vmatpush2.msra.mxu0 0.0
      %1750 = vmatprep.subr.mxu0 0.0
      %1751 = vmatpush2.msra.mxu0 0.0
      %1752 = vmatprep.subr.mxu0 0.0
      %1753 = vmatpush2.msra.mxu0 0.0
      %1754 = vmatprep.subr.mxu0 0.0
      %1755 = vmatpush2.msra.mxu0 0.0
      %1756 = vmatprep.subr.mxu0 0.0
      %1757 = vmatpush2.msra.mxu0 0.0
      %1758 = vmatprep.mubr.f32.mxu0 0.0
      %v1759 = vand.u32 %v1305, 4294901760
      %1760 = vmatmul.mubr.f32.gmra.mxu0 %v1759
      %v1761 = vpop.f32.mrf.mxu0
      %v1762 = vadd.f32 %v1667, %v1761
      %v1763 = vpop.f32.mrf.mxu0
      %1764 = vdwg.mxu0
      %1765 = vmatprep.subr.mxu0 0.0
      %1766 = vmatpush1.msra.mxu0 0.0
      %1767 = vmatprep.subr.mxu0 0.0
      %1768 = vmatpush1.msra.mxu0 0.0
      %1769 = vmatprep.subr.mxu0 0.0
      %1770 = vmatpush1.msra.mxu0 0.0
      %1771 = vmatprep.subr.mxu0 0.0
      %1772 = vmatpush1.msra.mxu0 0.0
      %1773 = vmatprep.subr.mxu0 0.0
      %1774 = vmatpush1.msra.mxu0 0.0
      %1775 = vmatprep.subr.mxu0 0.0
      %1776 = vmatpush1.msra.mxu0 0.0
      %1777 = vmatprep.subr.mxu0 0.0
      %1778 = vmatpush1.msra.mxu0 0.0
      %1779 = vmatprep.subr.mxu0 0.0
      %1780 = vmatpush1.msra.mxu0 0.0
      %1781 = vmatprep.subr.mxu0 0.0
      %v1782 = vand.u32 %v1295, 4294901760
      %1783 = vmatpush1.msra.mxu0 %v1782
      %1784 = vmatprep.subr.mxu0 0.0
      %v1785 = vand.u32 %v1294, 4294901760
      %1786 = vmatpush1.msra.mxu0 %v1785
      %1787 = vmatprep.subr.mxu0 0.0
      %v1788 = vand.u32 %v1293, 4294901760
      %1789 = vmatpush1.msra.mxu0 %v1788
      %1790 = vmatprep.subr.mxu0 0.0
      %v1791 = vand.u32 %v1292, 4294901760
      %1792 = vmatpush1.msra.mxu0 %v1791
      %1793 = vmatprep.subr.mxu0 0.0
      %v1794 = vand.u32 %v1291, 4294901760
      %1795 = vmatpush1.msra.mxu0 %v1794
      %1796 = vmatprep.subr.mxu0 0.0
      %v1797 = vand.u32 %v1290, 4294901760
      %1798 = vmatpush1.msra.mxu0 %v1797
      %1799 = vmatprep.subr.mxu0 0.0
      %v1800 = vand.u32 %v1289, 4294901760
      %1801 = vmatpush1.msra.mxu0 %v1800
      %1802 = vmatprep.subr.mxu0 0.0
      %v1803 = vand.u32 %v1288, 4294901760
      %1804 = vmatpush1.msra.mxu0 %v1803
      %1805 = vmatprep.subr.mxu0 0.0
      %1806 = vmatpush2.msra.mxu0 0.0
      %1807 = vmatprep.subr.mxu0 0.0
      %1808 = vmatpush2.msra.mxu0 0.0
      %1809 = vmatprep.subr.mxu0 0.0
      %1810 = vmatpush2.msra.mxu0 0.0
      %1811 = vmatprep.subr.mxu0 0.0
      %1812 = vmatpush2.msra.mxu0 0.0
      %1813 = vmatprep.subr.mxu0 0.0
      %1814 = vmatpush2.msra.mxu0 0.0
      %1815 = vmatprep.subr.mxu0 0.0
      %1816 = vmatpush2.msra.mxu0 0.0
      %1817 = vmatprep.subr.mxu0 0.0
      %1818 = vmatpush2.msra.mxu0 0.0
      %1819 = vmatprep.subr.mxu0 0.0
      %1820 = vmatpush2.msra.mxu0 0.0
      %1821 = vmatprep.subr.mxu0 0.0
      %1822 = vmatpush2.msra.mxu0 0.0
      %1823 = vmatprep.subr.mxu0 0.0
      %1824 = vmatpush2.msra.mxu0 0.0
      %1825 = vmatprep.subr.mxu0 0.0
      %1826 = vmatpush2.msra.mxu0 0.0
      %1827 = vmatprep.subr.mxu0 0.0
      %1828 = vmatpush2.msra.mxu0 0.0
      %1829 = vmatprep.subr.mxu0 0.0
      %1830 = vmatpush2.msra.mxu0 0.0
      %1831 = vmatprep.subr.mxu0 0.0
      %1832 = vmatpush2.msra.mxu0 0.0
      %1833 = vmatprep.subr.mxu0 0.0
      %1834 = vmatpush2.msra.mxu0 0.0
      %1835 = vmatprep.subr.mxu0 0.0
      %1836 = vmatpush2.msra.mxu0 0.0
      %1837 = vmatprep.mubr.f32.mxu0 0.0
      %v1838 = vand.u32 %v1305, 4294901760
      %1839 = vmatmul.mubr.f32.gmra.mxu0 %v1838
      %v1840 = vpop.f32.mrf.mxu0
      %v1841 = vadd.f32 %v1762, %v1840
      %v1842 = vpop.f32.mrf.mxu0
      %1843 = vdwg.mxu0
      %vm1844 = vcmp.ge.f32.partialorder %v1841, 0.0
      %v1845 = vmul.f32 %v1841, 0.2
      %v1846 = vsel %vm1844, %v1841, %v1845
      %v1847 = vld [vmem:[%s7] sm:$0xff]
      %v1848 = vld [vmem:[%s7 + $0x8] sm:$0xff]
      %v1849 = vld [vmem:[%s7 + $0x10] sm:$0xff]
      %v1850 = vld [vmem:[%s7 + $0x18] sm:$0xff]
      %v1851 = vld [vmem:[%s7 + $0x20] sm:$0xff]
      %v1852 = vld [vmem:[%s7 + $0x28] sm:$0xff]
      %v1853 = vld [vmem:[%s7 + $0x30] sm:$0xff]
      %v1854 = vld [vmem:[%s7 + $0x38] sm:$0xff]
      %v1855 = vld [vmem:[%s8] sm:$0x1]
      %v1857 = vlaneseq
      %v1858 = vshrl.u32 %v1857, 7
      %v1859 = vsub.s32 0, %v1858
      %v1860 = vrot.slane %v1855, %v1859
      %v1863 = vsel %vm1303, %v1846, 0
      %1865 = vmatprep.subr.mxu0 0.0
      %1866 = vmatpush1.msra.mxu0 0.0
      %1867 = vmatprep.subr.mxu0 0.0
      %1868 = vmatpush1.msra.mxu0 0.0
      %1869 = vmatprep.subr.mxu0 0.0
      %1870 = vmatpush1.msra.mxu0 0.0
      %1871 = vmatprep.subr.mxu0 0.0
      %1872 = vmatpush1.msra.mxu0 0.0
      %1873 = vmatprep.subr.mxu0 0.0
      %1874 = vmatpush1.msra.mxu0 0.0
      %1875 = vmatprep.subr.mxu0 0.0
      %1876 = vmatpush1.msra.mxu0 0.0
      %1877 = vmatprep.subr.mxu0 0.0
      %1878 = vmatpush1.msra.mxu0 0.0
      %1879 = vmatprep.subr.mxu0 0.0
      %1880 = vmatpush1.msra.mxu0 0.0
      %1881 = vmatprep.subr.mxu0 0.0
      %v1882 = vand.u32 %v1854, 4294901760
      %1883 = vmatpush1.msra.mxu0 %v1882
      %1884 = vmatprep.subr.mxu0 0.0
      %v1885 = vand.u32 %v1853, 4294901760
      %1886 = vmatpush1.msra.mxu0 %v1885
      %1887 = vmatprep.subr.mxu0 0.0
      %v1888 = vand.u32 %v1852, 4294901760
      %1889 = vmatpush1.msra.mxu0 %v1888
      %1890 = vmatprep.subr.mxu0 0.0
      %v1891 = vand.u32 %v1851, 4294901760
      %1892 = vmatpush1.msra.mxu0 %v1891
      %1893 = vmatprep.subr.mxu0 0.0
      %v1894 = vand.u32 %v1850, 4294901760
      %1895 = vmatpush1.msra.mxu0 %v1894
      %1896 = vmatprep.subr.mxu0 0.0
      %v1897 = vand.u32 %v1849, 4294901760
      %1898 = vmatpush1.msra.mxu0 %v1897
      %1899 = vmatprep.subr.mxu0 0.0
      %v1900 = vand.u32 %v1848, 4294901760
      %1901 = vmatpush1.msra.mxu0 %v1900
      %1902 = vmatprep.subr.mxu0 0.0
      %v1903 = vand.u32 %v1847, 4294901760
      %1904 = vmatpush1.msra.mxu0 %v1903
      %1905 = vmatprep.subr.mxu0 0.0
      %1906 = vmatpush2.msra.mxu0 0.0
      %1907 = vmatprep.subr.mxu0 0.0
      %1908 = vmatpush2.msra.mxu0 0.0
      %1909 = vmatprep.subr.mxu0 0.0
      %1910 = vmatpush2.msra.mxu0 0.0
      %1911 = vmatprep.subr.mxu0 0.0
      %1912 = vmatpush2.msra.mxu0 0.0
      %1913 = vmatprep.subr.mxu0 0.0
      %1914 = vmatpush2.msra.mxu0 0.0
      %1915 = vmatprep.subr.mxu0 0.0
      %1916 = vmatpush2.msra.mxu0 0.0
      %1917 = vmatprep.subr.mxu0 0.0
      %1918 = vmatpush2.msra.mxu0 0.0
      %1919 = vmatprep.subr.mxu0 0.0
      %1920 = vmatpush2.msra.mxu0 0.0
      %1921 = vmatprep.subr.mxu0 0.0
      %1922 = vmatpush2.msra.mxu0 0.0
      %1923 = vmatprep.subr.mxu0 0.0
      %1924 = vmatpush2.msra.mxu0 0.0
      %1925 = vmatprep.subr.mxu0 0.0
      %1926 = vmatpush2.msra.mxu0 0.0
      %1927 = vmatprep.subr.mxu0 0.0
      %1928 = vmatpush2.msra.mxu0 0.0
      %1929 = vmatprep.subr.mxu0 0.0
      %1930 = vmatpush2.msra.mxu0 0.0
      %1931 = vmatprep.subr.mxu0 0.0
      %1932 = vmatpush2.msra.mxu0 0.0
      %1933 = vmatprep.subr.mxu0 0.0
      %1934 = vmatpush2.msra.mxu0 0.0
      %1935 = vmatprep.subr.mxu0 0.0
      %1936 = vmatpush2.msra.mxu0 0.0
      %1937 = vmatprep.mubr.f32.mxu0 0.0
      %v1938 = vand.u32 %v1863, 4294901760
      %v1939 = vsub.f32 %v1863, %v1938
      %v1940 = vand.u32 %v1939, 4294901760
      %v1941 = vsub.f32 %v1939, %v1940
      %v1942 = vand.u32 %v1941, 4294901760
      %1943 = vmatmul.mubr.f32.gmra.mxu0 %v1942
      %v1944 = vpop.f32.mrf.mxu0
      %v1945 = vadd.f32 %v1860, %v1944
      %v1946 = vpop.f32.mrf.mxu0
      %1947 = vdwg.mxu0
      %1948 = vmatprep.subr.mxu0 0.0
      %1949 = vmatpush1.msra.mxu0 0.0
      %1950 = vmatprep.subr.mxu0 0.0
      %1951 = vmatpush1.msra.mxu0 0.0
      %1952 = vmatprep.subr.mxu0 0.0
      %1953 = vmatpush1.msra.mxu0 0.0
      %1954 = vmatprep.subr.mxu0 0.0
      %1955 = vmatpush1.msra.mxu0 0.0
      %1956 = vmatprep.subr.mxu0 0.0
      %1957 = vmatpush1.msra.mxu0 0.0
      %1958 = vmatprep.subr.mxu0 0.0
      %1959 = vmatpush1.msra.mxu0 0.0
      %1960 = vmatprep.subr.mxu0 0.0
      %1961 = vmatpush1.msra.mxu0 0.0
      %1962 = vmatprep.subr.mxu0 0.0
      %1963 = vmatpush1.msra.mxu0 0.0
      %1964 = vmatprep.subr.mxu0 0.0
      %v1965 = vand.u32 %v1854, 4294901760
      %v1966 = vsub.f32 %v1854, %v1965
      %v1967 = vand.u32 %v1966, 4294901760
      %v1968 = vsub.f32 %v1966, %v1967
      %v1969 = vand.u32 %v1968, 4294901760
      %1970 = vmatpush1.msra.mxu0 %v1969
      %1971 = vmatprep.subr.mxu0 0.0
      %v1972 = vand.u32 %v1853, 4294901760
      %v1973 = vsub.f32 %v1853, %v1972
      %v1974 = vand.u32 %v1973, 4294901760
      %v1975 = vsub.f32 %v1973, %v1974
      %v1976 = vand.u32 %v1975, 4294901760
      %1977 = vmatpush1.msra.mxu0 %v1976
      %1978 = vmatprep.subr.mxu0 0.0
      %v1979 = vand.u32 %v1852, 4294901760
      %v1980 = vsub.f32 %v1852, %v1979
      %v1981 = vand.u32 %v1980, 4294901760
      %v1982 = vsub.f32 %v1980, %v1981
      %v1983 = vand.u32 %v1982, 4294901760
      %1984 = vmatpush1.msra.mxu0 %v1983
      %1985 = vmatprep.subr.mxu0 0.0
      %v1986 = vand.u32 %v1851, 4294901760
      %v1987 = vsub.f32 %v1851, %v1986
      %v1988 = vand.u32 %v1987, 4294901760
      %v1989 = vsub.f32 %v1987, %v1988
      %v1990 = vand.u32 %v1989, 4294901760
      %1991 = vmatpush1.msra.mxu0 %v1990
      %1992 = vmatprep.subr.mxu0 0.0
      %v1993 = vand.u32 %v1850, 4294901760
      %v1994 = vsub.f32 %v1850, %v1993
      %v1995 = vand.u32 %v1994, 4294901760
      %v1996 = vsub.f32 %v1994, %v1995
      %v1997 = vand.u32 %v1996, 4294901760
      %1998 = vmatpush1.msra.mxu0 %v1997
      %1999 = vmatprep.subr.mxu0 0.0
      %v2000 = vand.u32 %v1849, 4294901760
      %v2001 = vsub.f32 %v1849, %v2000
      %v2002 = vand.u32 %v2001, 4294901760
      %v2003 = vsub.f32 %v2001, %v2002
      %v2004 = vand.u32 %v2003, 4294901760
      %2005 = vmatpush1.msra.mxu0 %v2004
      %2006 = vmatprep.subr.mxu0 0.0
      %v2007 = vand.u32 %v1848, 4294901760
      %v2008 = vsub.f32 %v1848, %v2007
      %v2009 = vand.u32 %v2008, 4294901760
      %v2010 = vsub.f32 %v2008, %v2009
      %v2011 = vand.u32 %v2010, 4294901760
      %2012 = vmatpush1.msra.mxu0 %v2011
      %2013 = vmatprep.subr.mxu0 0.0
      %v2014 = vand.u32 %v1847, 4294901760
      %v2015 = vsub.f32 %v1847, %v2014
      %v2016 = vand.u32 %v2015, 4294901760
      %v2017 = vsub.f32 %v2015, %v2016
      %v2018 = vand.u32 %v2017, 4294901760
      %2019 = vmatpush1.msra.mxu0 %v2018
      %2020 = vmatprep.subr.mxu0 0.0
      %2021 = vmatpush2.msra.mxu0 0.0
      %2022 = vmatprep.subr.mxu0 0.0
      %2023 = vmatpush2.msra.mxu0 0.0
      %2024 = vmatprep.subr.mxu0 0.0
      %2025 = vmatpush2.msra.mxu0 0.0
      %2026 = vmatprep.subr.mxu0 0.0
      %2027 = vmatpush2.msra.mxu0 0.0
      %2028 = vmatprep.subr.mxu0 0.0
      %2029 = vmatpush2.msra.mxu0 0.0
      %2030 = vmatprep.subr.mxu0 0.0
      %2031 = vmatpush2.msra.mxu0 0.0
      %2032 = vmatprep.subr.mxu0 0.0
      %2033 = vmatpush2.msra.mxu0 0.0
      %2034 = vmatprep.subr.mxu0 0.0
      %2035 = vmatpush2.msra.mxu0 0.0
      %2036 = vmatprep.subr.mxu0 0.0
      %2037 = vmatpush2.msra.mxu0 0.0
      %2038 = vmatprep.subr.mxu0 0.0
      %2039 = vmatpush2.msra.mxu0 0.0
      %2040 = vmatprep.subr.mxu0 0.0
      %2041 = vmatpush2.msra.mxu0 0.0
      %2042 = vmatprep.subr.mxu0 0.0
      %2043 = vmatpush2.msra.mxu0 0.0
      %2044 = vmatprep.subr.mxu0 0.0
      %2045 = vmatpush2.msra.mxu0 0.0
      %2046 = vmatprep.subr.mxu0 0.0
      %2047 = vmatpush2.msra.mxu0 0.0
      %2048 = vmatprep.subr.mxu0 0.0
      %2049 = vmatpush2.msra.mxu0 0.0
      %2050 = vmatprep.subr.mxu0 0.0
      %2051 = vmatpush2.msra.mxu0 0.0
      %2052 = vmatprep.mubr.f32.mxu0 0.0
      %v2053 = vand.u32 %v1863, 4294901760
      %2054 = vmatmul.mubr.f32.gmra.mxu0 %v2053
      %v2055 = vpop.f32.mrf.mxu0
      %v2056 = vadd.f32 %v1945, %v2055
      %v2057 = vpop.f32.mrf.mxu0
      %2058 = vdwg.mxu0
      %2059 = vmatprep.subr.mxu0 0.0
      %2060 = vmatpush1.msra.mxu0 0.0
      %2061 = vmatprep.subr.mxu0 0.0
      %2062 = vmatpush1.msra.mxu0 0.0
      %2063 = vmatprep.subr.mxu0 0.0
      %2064 = vmatpush1.msra.mxu0 0.0
      %2065 = vmatprep.subr.mxu0 0.0
      %2066 = vmatpush1.msra.mxu0 0.0
      %2067 = vmatprep.subr.mxu0 0.0
      %2068 = vmatpush1.msra.mxu0 0.0
      %2069 = vmatprep.subr.mxu0 0.0
      %2070 = vmatpush1.msra.mxu0 0.0
      %2071 = vmatprep.subr.mxu0 0.0
      %2072 = vmatpush1.msra.mxu0 0.0
      %2073 = vmatprep.subr.mxu0 0.0
      %2074 = vmatpush1.msra.mxu0 0.0
      %2075 = vmatprep.subr.mxu0 0.0
      %v2076 = vand.u32 %v1854, 4294901760
      %v2077 = vsub.f32 %v1854, %v2076
      %2078 = vmatpush1.msra.mxu0 %v2077
      %2079 = vmatprep.subr.mxu0 0.0
      %v2080 = vand.u32 %v1853, 4294901760
      %v2081 = vsub.f32 %v1853, %v2080
      %2082 = vmatpush1.msra.mxu0 %v2081
      %2083 = vmatprep.subr.mxu0 0.0
      %v2084 = vand.u32 %v1852, 4294901760
      %v2085 = vsub.f32 %v1852, %v2084
      %2086 = vmatpush1.msra.mxu0 %v2085
      %2087 = vmatprep.subr.mxu0 0.0
      %v2088 = vand.u32 %v1851, 4294901760
      %v2089 = vsub.f32 %v1851, %v2088
      %2090 = vmatpush1.msra.mxu0 %v2089
      %2091 = vmatprep.subr.mxu0 0.0
      %v2092 = vand.u32 %v1850, 4294901760
      %v2093 = vsub.f32 %v1850, %v2092
      %2094 = vmatpush1.msra.mxu0 %v2093
      %2095 = vmatprep.subr.mxu0 0.0
      %v2096 = vand.u32 %v1849, 4294901760
      %v2097 = vsub.f32 %v1849, %v2096
      %2098 = vmatpush1.msra.mxu0 %v2097
      %2099 = vmatprep.subr.mxu0 0.0
      %v2100 = vand.u32 %v1848, 4294901760
      %v2101 = vsub.f32 %v1848, %v2100
      %2102 = vmatpush1.msra.mxu0 %v2101
      %2103 = vmatprep.subr.mxu0 0.0
      %v2104 = vand.u32 %v1847, 4294901760
      %v2105 = vsub.f32 %v1847, %v2104
      %2106 = vmatpush1.msra.mxu0 %v2105
      %2107 = vmatprep.subr.mxu0 0.0
      %2108 = vmatpush2.msra.mxu0 0.0
      %2109 = vmatprep.subr.mxu0 0.0
      %2110 = vmatpush2.msra.mxu0 0.0
      %2111 = vmatprep.subr.mxu0 0.0
      %2112 = vmatpush2.msra.mxu0 0.0
      %2113 = vmatprep.subr.mxu0 0.0
      %2114 = vmatpush2.msra.mxu0 0.0
      %2115 = vmatprep.subr.mxu0 0.0
      %2116 = vmatpush2.msra.mxu0 0.0
      %2117 = vmatprep.subr.mxu0 0.0
      %2118 = vmatpush2.msra.mxu0 0.0
      %2119 = vmatprep.subr.mxu0 0.0
      %2120 = vmatpush2.msra.mxu0 0.0
      %2121 = vmatprep.subr.mxu0 0.0
      %2122 = vmatpush2.msra.mxu0 0.0
      %2123 = vmatprep.subr.mxu0 0.0
      %2124 = vmatpush2.msra.mxu0 0.0
      %2125 = vmatprep.subr.mxu0 0.0
      %2126 = vmatpush2.msra.mxu0 0.0
      %2127 = vmatprep.subr.mxu0 0.0
      %2128 = vmatpush2.msra.mxu0 0.0
      %2129 = vmatprep.subr.mxu0 0.0
      %2130 = vmatpush2.msra.mxu0 0.0
      %2131 = vmatprep.subr.mxu0 0.0
      %2132 = vmatpush2.msra.mxu0 0.0
      %2133 = vmatprep.subr.mxu0 0.0
      %2134 = vmatpush2.msra.mxu0 0.0
      %2135 = vmatprep.subr.mxu0 0.0
      %2136 = vmatpush2.msra.mxu0 0.0
      %2137 = vmatprep.subr.mxu0 0.0
      %2138 = vmatpush2.msra.mxu0 0.0
      %2139 = vmatprep.mubr.f32.mxu0 0.0
      %v2140 = vand.u32 %v1863, 4294901760
      %v2141 = vsub.f32 %v1863, %v2140
      %2142 = vmatmul.mubr.f32.gmra.mxu0 %v2141
      %v2143 = vpop.f32.mrf.mxu0
      %v2144 = vadd.f32 %v2056, %v2143
      %v2145 = vpop.f32.mrf.mxu0
      %2146 = vdwg.mxu0
      %2147 = vmatprep.subr.mxu0 0.0
      %2148 = vmatpush1.msra.mxu0 0.0
      %2149 = vmatprep.subr.mxu0 0.0
      %2150 = vmatpush1.msra.mxu0 0.0
      %2151 = vmatprep.subr.mxu0 0.0
      %2152 = vmatpush1.msra.mxu0 0.0
      %2153 = vmatprep.subr.mxu0 0.0
      %2154 = vmatpush1.msra.mxu0 0.0
      %2155 = vmatprep.subr.mxu0 0.0
      %2156 = vmatpush1.msra.mxu0 0.0
      %2157 = vmatprep.subr.mxu0 0.0
      %2158 = vmatpush1.msra.mxu0 0.0
      %2159 = vmatprep.subr.mxu0 0.0
      %2160 = vmatpush1.msra.mxu0 0.0
      %2161 = vmatprep.subr.mxu0 0.0
      %2162 = vmatpush1.msra.mxu0 0.0
      %2163 = vmatprep.subr.mxu0 0.0
      %v2164 = vand.u32 %v1854, 4294901760
      %2165 = vmatpush1.msra.mxu0 %v2164
      %2166 = vmatprep.subr.mxu0 0.0
      %v2167 = vand.u32 %v1853, 4294901760
      %2168 = vmatpush1.msra.mxu0 %v2167
      %2169 = vmatprep.subr.mxu0 0.0
      %v2170 = vand.u32 %v1852, 4294901760
      %2171 = vmatpush1.msra.mxu0 %v2170
      %2172 = vmatprep.subr.mxu0 0.0
      %v2173 = vand.u32 %v1851, 4294901760
      %2174 = vmatpush1.msra.mxu0 %v2173
      %2175 = vmatprep.subr.mxu0 0.0
      %v2176 = vand.u32 %v1850, 4294901760
      %2177 = vmatpush1.msra.mxu0 %v2176
      %2178 = vmatprep.subr.mxu0 0.0
      %v2179 = vand.u32 %v1849, 4294901760
      %2180 = vmatpush1.msra.mxu0 %v2179
      %2181 = vmatprep.subr.mxu0 0.0
      %v2182 = vand.u32 %v1848, 4294901760
      %2183 = vmatpush1.msra.mxu0 %v2182
      %2184 = vmatprep.subr.mxu0 0.0
      %v2185 = vand.u32 %v1847, 4294901760
      %2186 = vmatpush1.msra.mxu0 %v2185
      %2187 = vmatprep.subr.mxu0 0.0
      %2188 = vmatpush2.msra.mxu0 0.0
      %2189 = vmatprep.subr.mxu0 0.0
      %2190 = vmatpush2.msra.mxu0 0.0
      %2191 = vmatprep.subr.mxu0 0.0
      %2192 = vmatpush2.msra.mxu0 0.0
      %2193 = vmatprep.subr.mxu0 0.0
      %2194 = vmatpush2.msra.mxu0 0.0
      %2195 = vmatprep.subr.mxu0 0.0
      %2196 = vmatpush2.msra.mxu0 0.0
      %2197 = vmatprep.subr.mxu0 0.0
      %2198 = vmatpush2.msra.mxu0 0.0
      %2199 = vmatprep.subr.mxu0 0.0
      %2200 = vmatpush2.msra.mxu0 0.0
      %2201 = vmatprep.subr.mxu0 0.0
      %2202 = vmatpush2.msra.mxu0 0.0
      %2203 = vmatprep.subr.mxu0 0.0
      %2204 = vmatpush2.msra.mxu0 0.0
      %2205 = vmatprep.subr.mxu0 0.0
      %2206 = vmatpush2.msra.mxu0 0.0
      %2207 = vmatprep.subr.mxu0 0.0
      %2208 = vmatpush2.msra.mxu0 0.0
      %2209 = vmatprep.subr.mxu0 0.0
      %2210 = vmatpush2.msra.mxu0 0.0
      %2211 = vmatprep.subr.mxu0 0.0
      %2212 = vmatpush2.msra.mxu0 0.0
      %2213 = vmatprep.subr.mxu0 0.0
      %2214 = vmatpush2.msra.mxu0 0.0
      %2215 = vmatprep.subr.mxu0 0.0
      %2216 = vmatpush2.msra.mxu0 0.0
      %2217 = vmatprep.subr.mxu0 0.0
      %2218 = vmatpush2.msra.mxu0 0.0
      %2219 = vmatprep.mubr.f32.mxu0 0.0
      %v2220 = vand.u32 %v1863, 4294901760
      %v2221 = vsub.f32 %v1863, %v2220
      %v2222 = vand.u32 %v2221, 4294901760
      %2223 = vmatmul.mubr.f32.gmra.mxu0 %v2222
      %v2224 = vpop.f32.mrf.mxu0
      %v2225 = vadd.f32 %v2144, %v2224
      %v2226 = vpop.f32.mrf.mxu0
      %2227 = vdwg.mxu0
      %2228 = vmatprep.subr.mxu0 0.0
      %2229 = vmatpush1.msra.mxu0 0.0
      %2230 = vmatprep.subr.mxu0 0.0
      %2231 = vmatpush1.msra.mxu0 0.0
      %2232 = vmatprep.subr.mxu0 0.0
      %2233 = vmatpush1.msra.mxu0 0.0
      %2234 = vmatprep.subr.mxu0 0.0
      %2235 = vmatpush1.msra.mxu0 0.0
      %2236 = vmatprep.subr.mxu0 0.0
      %2237 = vmatpush1.msra.mxu0 0.0
      %2238 = vmatprep.subr.mxu0 0.0
      %2239 = vmatpush1.msra.mxu0 0.0
      %2240 = vmatprep.subr.mxu0 0.0
      %2241 = vmatpush1.msra.mxu0 0.0
      %2242 = vmatprep.subr.mxu0 0.0
      %2243 = vmatpush1.msra.mxu0 0.0
      %2244 = vmatprep.subr.mxu0 0.0
      %v2245 = vand.u32 %v1854, 4294901760
      %v2246 = vsub.f32 %v1854, %v2245
      %v2247 = vand.u32 %v2246, 4294901760
      %2248 = vmatpush1.msra.mxu0 %v2247
      %2249 = vmatprep.subr.mxu0 0.0
      %v2250 = vand.u32 %v1853, 4294901760
      %v2251 = vsub.f32 %v1853, %v2250
      %v2252 = vand.u32 %v2251, 4294901760
      %2253 = vmatpush1.msra.mxu0 %v2252
      %2254 = vmatprep.subr.mxu0 0.0
      %v2255 = vand.u32 %v1852, 4294901760
      %v2256 = vsub.f32 %v1852, %v2255
      %v2257 = vand.u32 %v2256, 4294901760
      %2258 = vmatpush1.msra.mxu0 %v2257
      %2259 = vmatprep.subr.mxu0 0.0
      %v2260 = vand.u32 %v1851, 4294901760
      %v2261 = vsub.f32 %v1851, %v2260
      %v2262 = vand.u32 %v2261, 4294901760
      %2263 = vmatpush1.msra.mxu0 %v2262
      %2264 = vmatprep.subr.mxu0 0.0
      %v2265 = vand.u32 %v1850, 4294901760
      %v2266 = vsub.f32 %v1850, %v2265
      %v2267 = vand.u32 %v2266, 4294901760
      %2268 = vmatpush1.msra.mxu0 %v2267
      %2269 = vmatprep.subr.mxu0 0.0
      %v2270 = vand.u32 %v1849, 4294901760
      %v2271 = vsub.f32 %v1849, %v2270
      %v2272 = vand.u32 %v2271, 4294901760
      %2273 = vmatpush1.msra.mxu0 %v2272
      %2274 = vmatprep.subr.mxu0 0.0
      %v2275 = vand.u32 %v1848, 4294901760
      %v2276 = vsub.f32 %v1848, %v2275
      %v2277 = vand.u32 %v2276, 4294901760
      %2278 = vmatpush1.msra.mxu0 %v2277
      %2279 = vmatprep.subr.mxu0 0.0
      %v2280 = vand.u32 %v1847, 4294901760
      %v2281 = vsub.f32 %v1847, %v2280
      %v2282 = vand.u32 %v2281, 4294901760
      %2283 = vmatpush1.msra.mxu0 %v2282
      %2284 = vmatprep.subr.mxu0 0.0
      %2285 = vmatpush2.msra.mxu0 0.0
      %2286 = vmatprep.subr.mxu0 0.0
      %2287 = vmatpush2.msra.mxu0 0.0
      %2288 = vmatprep.subr.mxu0 0.0
      %2289 = vmatpush2.msra.mxu0 0.0
      %2290 = vmatprep.subr.mxu0 0.0
      %2291 = vmatpush2.msra.mxu0 0.0
      %2292 = vmatprep.subr.mxu0 0.0
      %2293 = vmatpush2.msra.mxu0 0.0
      %2294 = vmatprep.subr.mxu0 0.0
      %2295 = vmatpush2.msra.mxu0 0.0
      %2296 = vmatprep.subr.mxu0 0.0
      %2297 = vmatpush2.msra.mxu0 0.0
      %2298 = vmatprep.subr.mxu0 0.0
      %2299 = vmatpush2.msra.mxu0 0.0
      %2300 = vmatprep.subr.mxu0 0.0
      %2301 = vmatpush2.msra.mxu0 0.0
      %2302 = vmatprep.subr.mxu0 0.0
      %2303 = vmatpush2.msra.mxu0 0.0
      %2304 = vmatprep.subr.mxu0 0.0
      %2305 = vmatpush2.msra.mxu0 0.0
      %2306 = vmatprep.subr.mxu0 0.0
      %2307 = vmatpush2.msra.mxu0 0.0
      %2308 = vmatprep.subr.mxu0 0.0
      %2309 = vmatpush2.msra.mxu0 0.0
      %2310 = vmatprep.subr.mxu0 0.0
      %2311 = vmatpush2.msra.mxu0 0.0
      %2312 = vmatprep.subr.mxu0 0.0
      %2313 = vmatpush2.msra.mxu0 0.0
      %2314 = vmatprep.subr.mxu0 0.0
      %2315 = vmatpush2.msra.mxu0 0.0
      %2316 = vmatprep.mubr.f32.mxu0 0.0
      %v2317 = vand.u32 %v1863, 4294901760
      %2318 = vmatmul.mubr.f32.gmra.mxu0 %v2317
      %v2319 = vpop.f32.mrf.mxu0
      %v2320 = vadd.f32 %v2225, %v2319
      %v2321 = vpop.f32.mrf.mxu0
      %2322 = vdwg.mxu0
      %2323 = vmatprep.subr.mxu0 0.0
      %2324 = vmatpush1.msra.mxu0 0.0
      %2325 = vmatprep.subr.mxu0 0.0
      %2326 = vmatpush1.msra.mxu0 0.0
      %2327 = vmatprep.subr.mxu0 0.0
      %2328 = vmatpush1.msra.mxu0 0.0
      %2329 = vmatprep.subr.mxu0 0.0
      %2330 = vmatpush1.msra.mxu0 0.0
      %2331 = vmatprep.subr.mxu0 0.0
      %2332 = vmatpush1.msra.mxu0 0.0
      %2333 = vmatprep.subr.mxu0 0.0
      %2334 = vmatpush1.msra.mxu0 0.0
      %2335 = vmatprep.subr.mxu0 0.0
      %2336 = vmatpush1.msra.mxu0 0.0
      %2337 = vmatprep.subr.mxu0 0.0
      %2338 = vmatpush1.msra.mxu0 0.0
      %2339 = vmatprep.subr.mxu0 0.0
      %v2340 = vand.u32 %v1854, 4294901760
      %2341 = vmatpush1.msra.mxu0 %v2340
      %2342 = vmatprep.subr.mxu0 0.0
      %v2343 = vand.u32 %v1853, 4294901760
      %2344 = vmatpush1.msra.mxu0 %v2343
      %2345 = vmatprep.subr.mxu0 0.0
      %v2346 = vand.u32 %v1852, 4294901760
      %2347 = vmatpush1.msra.mxu0 %v2346
      %2348 = vmatprep.subr.mxu0 0.0
      %v2349 = vand.u32 %v1851, 4294901760
      %2350 = vmatpush1.msra.mxu0 %v2349
      %2351 = vmatprep.subr.mxu0 0.0
      %v2352 = vand.u32 %v1850, 4294901760
      %2353 = vmatpush1.msra.mxu0 %v2352
      %2354 = vmatprep.subr.mxu0 0.0
      %v2355 = vand.u32 %v1849, 4294901760
      %2356 = vmatpush1.msra.mxu0 %v2355
      %2357 = vmatprep.subr.mxu0 0.0
      %v2358 = vand.u32 %v1848, 4294901760
      %2359 = vmatpush1.msra.mxu0 %v2358
      %2360 = vmatprep.subr.mxu0 0.0
      %v2361 = vand.u32 %v1847, 4294901760
      %2362 = vmatpush1.msra.mxu0 %v2361
      %2363 = vmatprep.subr.mxu0 0.0
      %2364 = vmatpush2.msra.mxu0 0.0
      %2365 = vmatprep.subr.mxu0 0.0
      %2366 = vmatpush2.msra.mxu0 0.0
      %2367 = vmatprep.subr.mxu0 0.0
      %2368 = vmatpush2.msra.mxu0 0.0
      %2369 = vmatprep.subr.mxu0 0.0
      %2370 = vmatpush2.msra.mxu0 0.0
      %2371 = vmatprep.subr.mxu0 0.0
      %2372 = vmatpush2.msra.mxu0 0.0
      %2373 = vmatprep.subr.mxu0 0.0
      %2374 = vmatpush2.msra.mxu0 0.0
      %2375 = vmatprep.subr.mxu0 0.0
      %2376 = vmatpush2.msra.mxu0 0.0
      %2377 = vmatprep.subr.mxu0 0.0
      %2378 = vmatpush2.msra.mxu0 0.0
      %2379 = vmatprep.subr.mxu0 0.0
      %2380 = vmatpush2.msra.mxu0 0.0
      %2381 = vmatprep.subr.mxu0 0.0
      %2382 = vmatpush2.msra.mxu0 0.0
      %2383 = vmatprep.subr.mxu0 0.0
      %2384 = vmatpush2.msra.mxu0 0.0
      %2385 = vmatprep.subr.mxu0 0.0
      %2386 = vmatpush2.msra.mxu0 0.0
      %2387 = vmatprep.subr.mxu0 0.0
      %2388 = vmatpush2.msra.mxu0 0.0
      %2389 = vmatprep.subr.mxu0 0.0
      %2390 = vmatpush2.msra.mxu0 0.0
      %2391 = vmatprep.subr.mxu0 0.0
      %2392 = vmatpush2.msra.mxu0 0.0
      %2393 = vmatprep.subr.mxu0 0.0
      %2394 = vmatpush2.msra.mxu0 0.0
      %2395 = vmatprep.mubr.f32.mxu0 0.0
      %v2396 = vand.u32 %v1863, 4294901760
      %2397 = vmatmul.mubr.f32.gmra.mxu0 %v2396
      %v2398 = vpop.f32.mrf.mxu0
      %v2399 = vadd.f32 %v2320, %v2398
      %v2400 = vpop.f32.mrf.mxu0
      %2401 = vdwg.mxu0
      %vm2402 = vcmp.ge.f32.partialorder %v2399, 0.0
      %v2403 = vmul.f32 %v2399, 0.05
      %v2404 = vsel %vm2402, %v2399, %v2403
      %vm2405 = vcmask 261120
      %2406 = vst.msk [vmem:[%s344] sm:$0xff] %vm2405, %v2404
      %p2407 = scmp.lt.s32.totalorder %s20, 7
      %s2408 = scalar_select %p2407, %s20, 7
      %s2409 = smul.addr %s2408, 8
      %s2410 = scalar_lea.vmem %s9, %s2409
      // Predicated region
      $region57: #{generator_forward.1} parent=55 // pred_check
        %p2411 = pneg %p237
      $region58: #{generator_forward.1} parent=55 // pred_check_branch
        %2413 = sbr.rel (%p2411) target = $region60
      $region59: #{generator_forward.1} parent=55 // pred_region
        _
      $region60: #{generator_forward.1} parent=55 // pred_fallthru
        _
    $region56: #{generator_forward.1} parent=5 // pred_fallthru
      _
    %p2414 = scmp.le.s32.totalorder 2, %s15
    // Predicated region
    $region61: #{generator_forward.1} parent=5 // pred_check
      %p2415 = pneg %p2414
    $region62: #{generator_forward.1} parent=5 // pred_check_branch
      %2417 = sbr.rel (%p2415) target = $region64
    $region63: #{generator_forward.1} parent=5 // pred_region
      %s2418 = ssub.s32 %s15, 2
      // Predicated region
      $region65: #{generator_forward.1} parent=63 // pred_check
        %p2419 = pneg %p243
      $region66: #{generator_forward.1} parent=63 // pred_check_branch
        %2421 = sbr.rel (%p2419) target = $region68
      $region67: #{generator_forward.1} parent=63 // pred_region
        %p2422 = scmp.lt.s32.totalorder %s21, 7
        %s2423 = scalar_select %p2422, %s21, 7
        %s2424 = smul.addr %s2423, 8
        %s2425 = scalar_lea.vmem %s9, %s2424
      $region68: #{generator_forward.1} parent=63 // pred_fallthru
        _
    $region64: #{generator_forward.1} parent=5 // pred_fallthru
      _
  $region6: #{generator_forward.1} parent=0 // loop_footer
    %s19 = sadd.s32 1, %s15
  $region7: #{generator_forward.1} parent=0 // loop_footer_branch
    %14 = sbr.rel target = $region3
  $region8: #{generator_forward.1} parent=0 // loop_exit
    _

</llo_original>
